<compile_context>
chip_gen: v6e
topology: v6e:2x2x1
jax: 0.10.0
libtpu: 0.0.40
codegen_flags: <defaults>
</compile_context>

<pallas_src>
import jax
import jax.numpy as jnp
from jax.experimental import pallas as pl
from jax.experimental.pallas import tpu as pltpu


def _round_up(x, m):
    return -(-x // m) * m


def _classifier_kernel(x_ref, w1_ref, b1_ref, w2_ref, b2_ref,
                       labels_ref, mask_ref,
                       prob_ref, nll_ref, corr_ref):
    # x_ref:      (1, L, TS, D) bf16 hidden states of this seq tile, all layers
    # w1_ref:     (L, D, H) bf16 first linear weight with softmax(layer_w) folded in
    # b1_ref:     (1, H) f32 ; w2_ref: (H, C) bf16 ; b2_ref: (1, C) f32
    # labels_ref: (1, TS, 1) int32 ; mask_ref: (1, TS, 1) f32
    # prob_ref:   (1, TS, C) f32 log-probs
    # nll_ref / corr_ref: (1, 1, 128) f32 per-tile partial sums (lane-broadcast)
    L = w1_ref.shape[0]
    C = w2_ref.shape[1]

    # select_hidden='weighted_sum_norm' + Linear(D->H) fused: softmax(layer_w)
    # is pre-folded into w1, so the weighted layer sum becomes L accumulated
    # bf16 MXU matmuls over per-layer slices already resident in VMEM.
    h = jnp.dot(x_ref[0, 0], w1_ref[0], preferred_element_type=jnp.float32)
    for l in range(1, L):
        h = h + jnp.dot(x_ref[0, l], w1_ref[l], preferred_element_type=jnp.float32)
    h = h + b1_ref[...]

    # dropout is identity in eval mode; ReLU.
    # TODO(synk): training-mode nn.Dropout (random mask) not implemented; eval identity used.
    h = jnp.maximum(h, 0.0)

    # Linear(H -> C); bf16 MXU inputs, f32 accumulation.
    logits = jnp.dot(h.astype(w2_ref.dtype), w2_ref[...],
                     preferred_element_type=jnp.float32) + b2_ref[...]

    # stable LogSoftmax(dim=-1)
    m = jnp.max(logits, axis=-1, keepdims=True)
    s = logits - m
    lse = jnp.log(jnp.sum(jnp.exp(s), axis=-1, keepdims=True))
    logp = s - lse
    prob_ref[0] = logp

    labels = labels_ref[0]                  # (TS, 1) int32
    valid = mask_ref[0] > 0.0               # (TS, 1) bool
    cls_ids = jax.lax.broadcasted_iota(jnp.int32, logp.shape, 1)   # (TS, C)

    # per-token NLL: gather the label column via iota-compare (no XLA one_hot)
    sel = (cls_ids == labels).astype(jnp.float32)
    nll = -jnp.sum(logp * sel, axis=-1, keepdims=True)             # (TS, 1)
    nll = jnp.where(valid, nll, 0.0)

    # argmax (first max index) via min over indices attaining the row max
    row_max = jnp.max(logp, axis=-1, keepdims=True)
    pred = jnp.min(jnp.where(logp == row_max, cls_ids, C), axis=-1, keepdims=True)
    corr = jnp.where(jnp.logical_and(pred == labels, valid), 1.0, 0.0)

    # reduce stats to per-tile scalars in-kernel; store lane-broadcast (unmasked vst)
    ones_blk = jnp.ones(nll_ref.shape, jnp.float32)
    nll_ref[...] = ones_blk * jnp.sum(nll)
    corr_ref[...] = ones_blk * jnp.sum(corr)


def linear_classifier_forward(features, labels, label_mask, params, *, seq_tile=1024):
    """Equivalent of LinearClassifier.forward(features, labels, label_mask)."""
    B, L, S, D = features.shape
    W1, b1, W2, b2 = params["W1"], params["b1"], params["W2"], params["b2"]
    H = W1.shape[1]
    C = W2.shape[1]

    # truncate to common length (identity here; kept for fidelity with PyTorch).
    T = min(S, labels.shape[-1])
    features = features[:, :, :T, :]
    labels = labels[:, :T]
    label_mask = label_mask[:, :T]

    # 'weighted_sum_norm': softmax over the layer-weight parameter, folded into
    # the first linear's per-layer weight slices:
    #   (sum_l w_l f_l) @ W1 == sum_l f_l @ (w_l * W1)
    w_norm = jax.nn.softmax(params["weight"][:L].astype(jnp.float32))
    W1_fold = (w_norm[:, None, None]
               * W1.astype(jnp.float32)[None, :, :]).astype(jnp.bfloat16)   # (L, D, H)
    W2_b = W2.astype(jnp.bfloat16)
    b1_r = b1.reshape(1, H).astype(jnp.float32)
    b2_r = b2.reshape(1, C).astype(jnp.float32)

    # Fixed-size seq tiles (multiple of 8) -> many pipelined "parallel" grid
    # steps; next tile's DMA overlaps current compute, VMEM footprint bounded
    # independent of B*S (~1.5 MiB double-buffered x at tile=1024).
    tile_s = min(seq_tile, _round_up(T, 8))
    n_tiles = pl.cdiv(T, tile_s)
    S_pad = n_tiles * tile_s

    # bf16 features halve the dominant HBM read and feed the MXU natively; the
    # layer axis is contracted in-kernel so no wrapper transpose is needed.
    # (If the upstream model already emits bf16 hidden states with aligned seq
    # length, this cast/pad is a no-op and features are read from HBM once.)
    x = features.astype(jnp.bfloat16)
    labels_c = labels.astype(jnp.int32)[..., None]        # (B, T, 1)
    mask_c = label_mask.astype(jnp.float32)[..., None]    # (B, T, 1)
    if S_pad != T:
        pad = S_pad - T
        x = jnp.pad(x, ((0, 0), (0, 0), (0, pad), (0, 0)))
        labels_c = jnp.pad(labels_c, ((0, 0), (0, pad), (0, 0)))
        mask_c = jnp.pad(mask_c, ((0, 0), (0, pad), (0, 0)))   # mask=0 -> no stats

    prob_pad, nll_part, corr_part = pl.pallas_call(
        _classifier_kernel,
        out_shape=(
            jax.ShapeDtypeStruct((B, S_pad, C), jnp.float32),
            jax.ShapeDtypeStruct((B, n_tiles, 128), jnp.float32),
            jax.ShapeDtypeStruct((B, n_tiles, 128), jnp.float32),
        ),
        grid_spec=pltpu.PrefetchScalarGridSpec(
            num_scalar_prefetch=0,
            grid=(B, n_tiles),
            in_specs=[
                pl.BlockSpec((1, L, tile_s, D), lambda b, s: (b, 0, s, 0)),  # features
                pl.BlockSpec((L, D, H), lambda b, s: (0, 0, 0)),             # folded W1
                pl.BlockSpec((1, H), lambda b, s: (0, 0)),                   # b1
                pl.BlockSpec((H, C), lambda b, s: (0, 0)),                   # W2
                pl.BlockSpec((1, C), lambda b, s: (0, 0)),                   # b2
                pl.BlockSpec((1, tile_s, 1), lambda b, s: (b, s, 0)),        # labels
                pl.BlockSpec((1, tile_s, 1), lambda b, s: (b, s, 0)),        # mask
            ],
            out_specs=(
                pl.BlockSpec((1, tile_s, C), lambda b, s: (b, s, 0)),        # log-probs
                pl.BlockSpec((1, 1, 128), lambda b, s: (b, s, 0)),           # nll partials
                pl.BlockSpec((1, 1, 128), lambda b, s: (b, s, 0)),           # correct partials
            ),
        ),
        compiler_params=pltpu.CompilerParams(
            dimension_semantics=("parallel", "parallel"),
        ),
    )(x, W1_fold, b1_r, W2_b, b2_r, labels_c, mask_c)

    prob = prob_pad[:, :T, :]

    valid = jnp.sum(label_mask)
    # CrossEntropyLoss(ignore_index) == mean over valid positions of per-token NLL.
    # TODO(synk): PyTorch returns NaN when every position is ignored; here it returns 0.
    loss = jnp.sum(nll_part[:, :, 0]) / jnp.maximum(valid.astype(jnp.float32), 1.0)
    correct = jnp.sum(corr_part[:, :, 0]).astype(jnp.int32)
    return loss, prob, correct, valid


if __name__ == "__main__":
    key = jax.random.PRNGKey(0)
    B, L, S, D = 2, 12, 8, 32      # batch, hidden layers, seq, feature dim
    H, C = 32, 10                  # hidden_size, class_num

    k1, k2, k3, k4, k5, k6, k7 = jax.random.split(key, 7)
    features = jax.random.normal(k1, (B, L, S, D), dtype=jnp.float32)
    labels = jax.random.randint(k2, (B, S), 0, C, dtype=jnp.int32)
    label_mask = (jax.random.uniform(k3, (B, S)) > 0.2).astype(jnp.int32)

    params = {
        # nn.Parameter(torch.ones(12) / 12)
        "weight": jnp.ones((12,), jnp.float32) / 12.0,
        "W1": jax.random.normal(k4, (D, H), jnp.float32) * 0.05,
        "b1": jax.random.normal(k5, (1, H), jnp.float32) * 0.01,
        "W2": jax.random.normal(k6, (H, C), jnp.float32) * 0.05,
        "b2": jax.random.normal(k7, (1, C), jnp.float32) * 0.01,
    }

    # TODO(synk): sequencial=True path (nn.GRU) and concat>1 frame-stacking
    # (_roll) are disabled by this config and not implemented as kernels.
    loss, prob, correct, valid = linear_classifier_forward(
        features, labels, label_mask, params
    )
    jax.block_until_ready((loss, prob, correct, valid))
    print("KERNEL_OK")
</pallas_src>

<mosaic_0001>
module attributes {stable_mosaic.version = 11 : i64} {
  func.func @_classifier_kernel(%arg0: i32, %arg1: i32, %arg2: memref<1x12x8x32xbf16, #tpu.memory_space<vmem>>, %arg3: memref<12x32x32xbf16, #tpu.memory_space<vmem>>, %arg4: memref<1x32xf32, #tpu.memory_space<vmem>>, %arg5: memref<32x10xbf16, #tpu.memory_space<vmem>>, %arg6: memref<1x10xf32, #tpu.memory_space<vmem>>, %arg7: memref<1x8x1xi32, #tpu.memory_space<vmem>>, %arg8: memref<1x8x1xf32, #tpu.memory_space<vmem>>, %arg9: memref<1x8x10xf32, #tpu.memory_space<vmem>>, %arg10: memref<1x1x128xf32, #tpu.memory_space<vmem>>, %arg11: memref<1x1x128xf32, #tpu.memory_space<vmem>>) attributes {dimension_semantics = [#tpu.dimension_semantics<parallel>, #tpu.dimension_semantics<parallel>], iteration_bounds = array<i64: 2, 1>, scalar_prefetch = 0 : i64, scratch_operands = 0 : i64, tpu.core_type = #tpu.core_type<tc>, window_params = [{transform_indices = @transform_0, window_bounds = array<i64: 1, 12, 8, 32>}, {pipeline_mode = #tpu.pipeline_mode<synchronous>, transform_indices = @transform_1, window_bounds = array<i64: 12, 32, 32>}, {pipeline_mode = #tpu.pipeline_mode<synchronous>, transform_indices = @transform_2, window_bounds = array<i64: 1, 32>}, {pipeline_mode = #tpu.pipeline_mode<synchronous>, transform_indices = @transform_3, window_bounds = array<i64: 32, 10>}, {pipeline_mode = #tpu.pipeline_mode<synchronous>, transform_indices = @transform_4, window_bounds = array<i64: 1, 10>}, {transform_indices = @transform_5, window_bounds = array<i64: 1, 8, 1>}, {transform_indices = @transform_6, window_bounds = array<i64: 1, 8, 1>}, {transform_indices = @transform_7, window_bounds = array<i64: 1, 8, 10>}, {transform_indices = @transform_8, window_bounds = array<i64: 1, 1, 128>}, {transform_indices = @transform_9, window_bounds = array<i64: 1, 1, 128>}]} {
    %c0 = arith.constant 0 : index
    %c0_0 = arith.constant 0 : index
    %c0_1 = arith.constant 0 : index
    %c0_2 = arith.constant 0 : index
    %0 = vector.load %arg2[%c0, %c0_0, %c0_1, %c0_2] : memref<1x12x8x32xbf16, #tpu.memory_space<vmem>>, vector<1x1x8x32xbf16>
    %1 = vector.shape_cast %0 : vector<1x1x8x32xbf16> to vector<8x32xbf16>
    %c0_3 = arith.constant 0 : index
    %c0_4 = arith.constant 0 : index
    %c0_5 = arith.constant 0 : index
    %2 = vector.load %arg3[%c0_3, %c0_4, %c0_5] : memref<12x32x32xbf16, #tpu.memory_space<vmem>>, vector<1x32x32xbf16>
    %3 = vector.shape_cast %2 : vector<1x32x32xbf16> to vector<32x32xbf16>
    %cst = arith.constant dense<0.000000e+00> : vector<8x32xf32>
    %4 = tpu.matmul %1, %3, %cst {dimension_numbers = #tpu.dot_dimension_numbers<[1], [0], [0], [1], [0, 0, 1, 1], [], []>} : vector<8x32xbf16>, vector<32x32xbf16>, vector<8x32xf32> -> vector<8x32xf32>
    %c0_6 = arith.constant 0 : index
    %c1 = arith.constant 1 : index
    %c0_7 = arith.constant 0 : index
    %c0_8 = arith.constant 0 : index
    %5 = vector.load %arg2[%c0_6, %c1, %c0_7, %c0_8] : memref<1x12x8x32xbf16, #tpu.memory_space<vmem>>, vector<1x1x8x32xbf16>
    %6 = vector.shape_cast %5 : vector<1x1x8x32xbf16> to vector<8x32xbf16>
    %c1_9 = arith.constant 1 : index
    %c0_10 = arith.constant 0 : index
    %c0_11 = arith.constant 0 : index
    %7 = vector.load %arg3[%c1_9, %c0_10, %c0_11] : memref<12x32x32xbf16, #tpu.memory_space<vmem>>, vector<1x32x32xbf16>
    %8 = vector.shape_cast %7 : vector<1x32x32xbf16> to vector<32x32xbf16>
    %cst_12 = arith.constant dense<0.000000e+00> : vector<8x32xf32>
    %9 = tpu.matmul %6, %8, %cst_12 {dimension_numbers = #tpu.dot_dimension_numbers<[1], [0], [0], [1], [0, 0, 1, 1], [], []>} : vector<8x32xbf16>, vector<32x32xbf16>, vector<8x32xf32> -> vector<8x32xf32>
    %10 = arith.addf %4, %9 : vector<8x32xf32>
    %c0_13 = arith.constant 0 : index
    %c2 = arith.constant 2 : index
    %c0_14 = arith.constant 0 : index
    %c0_15 = arith.constant 0 : index
    %11 = vector.load %arg2[%c0_13, %c2, %c0_14, %c0_15] : memref<1x12x8x32xbf16, #tpu.memory_space<vmem>>, vector<1x1x8x32xbf16>
    %12 = vector.shape_cast %11 : vector<1x1x8x32xbf16> to vector<8x32xbf16>
    %c2_16 = arith.constant 2 : index
    %c0_17 = arith.constant 0 : index
    %c0_18 = arith.constant 0 : index
    %13 = vector.load %arg3[%c2_16, %c0_17, %c0_18] : memref<12x32x32xbf16, #tpu.memory_space<vmem>>, vector<1x32x32xbf16>
    %14 = vector.shape_cast %13 : vector<1x32x32xbf16> to vector<32x32xbf16>
    %cst_19 = arith.constant dense<0.000000e+00> : vector<8x32xf32>
    %15 = tpu.matmul %12, %14, %cst_19 {dimension_numbers = #tpu.dot_dimension_numbers<[1], [0], [0], [1], [0, 0, 1, 1], [], []>} : vector<8x32xbf16>, vector<32x32xbf16>, vector<8x32xf32> -> vector<8x32xf32>
    %16 = arith.addf %10, %15 : vector<8x32xf32>
    %c0_20 = arith.constant 0 : index
    %c3 = arith.constant 3 : index
    %c0_21 = arith.constant 0 : index
    %c0_22 = arith.constant 0 : index
    %17 = vector.load %arg2[%c0_20, %c3, %c0_21, %c0_22] : memref<1x12x8x32xbf16, #tpu.memory_space<vmem>>, vector<1x1x8x32xbf16>
    %18 = vector.shape_cast %17 : vector<1x1x8x32xbf16> to vector<8x32xbf16>
    %c3_23 = arith.constant 3 : index
    %c0_24 = arith.constant 0 : index
    %c0_25 = arith.constant 0 : index
    %19 = vector.load %arg3[%c3_23, %c0_24, %c0_25] : memref<12x32x32xbf16, #tpu.memory_space<vmem>>, vector<1x32x32xbf16>
    %20 = vector.shape_cast %19 : vector<1x32x32xbf16> to vector<32x32xbf16>
    %cst_26 = arith.constant dense<0.000000e+00> : vector<8x32xf32>
    %21 = tpu.matmul %18, %20, %cst_26 {dimension_numbers = #tpu.dot_dimension_numbers<[1], [0], [0], [1], [0, 0, 1, 1], [], []>} : vector<8x32xbf16>, vector<32x32xbf16>, vector<8x32xf32> -> vector<8x32xf32>
    %22 = arith.addf %16, %21 : vector<8x32xf32>
    %c0_27 = arith.constant 0 : index
    %c4 = arith.constant 4 : index
    %c0_28 = arith.constant 0 : index
    %c0_29 = arith.constant 0 : index
    %23 = vector.load %arg2[%c0_27, %c4, %c0_28, %c0_29] : memref<1x12x8x32xbf16, #tpu.memory_space<vmem>>, vector<1x1x8x32xbf16>
    %24 = vector.shape_cast %23 : vector<1x1x8x32xbf16> to vector<8x32xbf16>
    %c4_30 = arith.constant 4 : index
    %c0_31 = arith.constant 0 : index
    %c0_32 = arith.constant 0 : index
    %25 = vector.load %arg3[%c4_30, %c0_31, %c0_32] : memref<12x32x32xbf16, #tpu.memory_space<vmem>>, vector<1x32x32xbf16>
    %26 = vector.shape_cast %25 : vector<1x32x32xbf16> to vector<32x32xbf16>
    %cst_33 = arith.constant dense<0.000000e+00> : vector<8x32xf32>
    %27 = tpu.matmul %24, %26, %cst_33 {dimension_numbers = #tpu.dot_dimension_numbers<[1], [0], [0], [1], [0, 0, 1, 1], [], []>} : vector<8x32xbf16>, vector<32x32xbf16>, vector<8x32xf32> -> vector<8x32xf32>
    %28 = arith.addf %22, %27 : vector<8x32xf32>
    %c0_34 = arith.constant 0 : index
    %c5 = arith.constant 5 : index
    %c0_35 = arith.constant 0 : index
    %c0_36 = arith.constant 0 : index
    %29 = vector.load %arg2[%c0_34, %c5, %c0_35, %c0_36] : memref<1x12x8x32xbf16, #tpu.memory_space<vmem>>, vector<1x1x8x32xbf16>
    %30 = vector.shape_cast %29 : vector<1x1x8x32xbf16> to vector<8x32xbf16>
    %c5_37 = arith.constant 5 : index
    %c0_38 = arith.constant 0 : index
    %c0_39 = arith.constant 0 : index
    %31 = vector.load %arg3[%c5_37, %c0_38, %c0_39] : memref<12x32x32xbf16, #tpu.memory_space<vmem>>, vector<1x32x32xbf16>
    %32 = vector.shape_cast %31 : vector<1x32x32xbf16> to vector<32x32xbf16>
    %cst_40 = arith.constant dense<0.000000e+00> : vector<8x32xf32>
    %33 = tpu.matmul %30, %32, %cst_40 {dimension_numbers = #tpu.dot_dimension_numbers<[1], [0], [0], [1], [0, 0, 1, 1], [], []>} : vector<8x32xbf16>, vector<32x32xbf16>, vector<8x32xf32> -> vector<8x32xf32>
    %34 = arith.addf %28, %33 : vector<8x32xf32>
    %c0_41 = arith.constant 0 : index
    %c6 = arith.constant 6 : index
    %c0_42 = arith.constant 0 : index
    %c0_43 = arith.constant 0 : index
    %35 = vector.load %arg2[%c0_41, %c6, %c0_42, %c0_43] : memref<1x12x8x32xbf16, #tpu.memory_space<vmem>>, vector<1x1x8x32xbf16>
    %36 = vector.shape_cast %35 : vector<1x1x8x32xbf16> to vector<8x32xbf16>
    %c6_44 = arith.constant 6 : index
    %c0_45 = arith.constant 0 : index
    %c0_46 = arith.constant 0 : index
    %37 = vector.load %arg3[%c6_44, %c0_45, %c0_46] : memref<12x32x32xbf16, #tpu.memory_space<vmem>>, vector<1x32x32xbf16>
    %38 = vector.shape_cast %37 : vector<1x32x32xbf16> to vector<32x32xbf16>
    %cst_47 = arith.constant dense<0.000000e+00> : vector<8x32xf32>
    %39 = tpu.matmul %36, %38, %cst_47 {dimension_numbers = #tpu.dot_dimension_numbers<[1], [0], [0], [1], [0, 0, 1, 1], [], []>} : vector<8x32xbf16>, vector<32x32xbf16>, vector<8x32xf32> -> vector<8x32xf32>
    %40 = arith.addf %34, %39 : vector<8x32xf32>
    %c0_48 = arith.constant 0 : index
    %c7 = arith.constant 7 : index
    %c0_49 = arith.constant 0 : index
    %c0_50 = arith.constant 0 : index
    %41 = vector.load %arg2[%c0_48, %c7, %c0_49, %c0_50] : memref<1x12x8x32xbf16, #tpu.memory_space<vmem>>, vector<1x1x8x32xbf16>
    %42 = vector.shape_cast %41 : vector<1x1x8x32xbf16> to vector<8x32xbf16>
    %c7_51 = arith.constant 7 : index
    %c0_52 = arith.constant 0 : index
    %c0_53 = arith.constant 0 : index
    %43 = vector.load %arg3[%c7_51, %c0_52, %c0_53] : memref<12x32x32xbf16, #tpu.memory_space<vmem>>, vector<1x32x32xbf16>
    %44 = vector.shape_cast %43 : vector<1x32x32xbf16> to vector<32x32xbf16>
    %cst_54 = arith.constant dense<0.000000e+00> : vector<8x32xf32>
    %45 = tpu.matmul %42, %44, %cst_54 {dimension_numbers = #tpu.dot_dimension_numbers<[1], [0], [0], [1], [0, 0, 1, 1], [], []>} : vector<8x32xbf16>, vector<32x32xbf16>, vector<8x32xf32> -> vector<8x32xf32>
    %46 = arith.addf %40, %45 : vector<8x32xf32>
    %c0_55 = arith.constant 0 : index
    %c8 = arith.constant 8 : index
    %c0_56 = arith.constant 0 : index
    %c0_57 = arith.constant 0 : index
    %47 = vector.load %arg2[%c0_55, %c8, %c0_56, %c0_57] : memref<1x12x8x32xbf16, #tpu.memory_space<vmem>>, vector<1x1x8x32xbf16>
    %48 = vector.shape_cast %47 : vector<1x1x8x32xbf16> to vector<8x32xbf16>
    %c8_58 = arith.constant 8 : index
    %c0_59 = arith.constant 0 : index
    %c0_60 = arith.constant 0 : index
    %49 = vector.load %arg3[%c8_58, %c0_59, %c0_60] : memref<12x32x32xbf16, #tpu.memory_space<vmem>>, vector<1x32x32xbf16>
    %50 = vector.shape_cast %49 : vector<1x32x32xbf16> to vector<32x32xbf16>
    %cst_61 = arith.constant dense<0.000000e+00> : vector<8x32xf32>
    %51 = tpu.matmul %48, %50, %cst_61 {dimension_numbers = #tpu.dot_dimension_numbers<[1], [0], [0], [1], [0, 0, 1, 1], [], []>} : vector<8x32xbf16>, vector<32x32xbf16>, vector<8x32xf32> -> vector<8x32xf32>
    %52 = arith.addf %46, %51 : vector<8x32xf32>
    %c0_62 = arith.constant 0 : index
    %c9 = arith.constant 9 : index
    %c0_63 = arith.constant 0 : index
    %c0_64 = arith.constant 0 : index
    %53 = vector.load %arg2[%c0_62, %c9, %c0_63, %c0_64] : memref<1x12x8x32xbf16, #tpu.memory_space<vmem>>, vector<1x1x8x32xbf16>
    %54 = vector.shape_cast %53 : vector<1x1x8x32xbf16> to vector<8x32xbf16>
    %c9_65 = arith.constant 9 : index
    %c0_66 = arith.constant 0 : index
    %c0_67 = arith.constant 0 : index
    %55 = vector.load %arg3[%c9_65, %c0_66, %c0_67] : memref<12x32x32xbf16, #tpu.memory_space<vmem>>, vector<1x32x32xbf16>
    %56 = vector.shape_cast %55 : vector<1x32x32xbf16> to vector<32x32xbf16>
    %cst_68 = arith.constant dense<0.000000e+00> : vector<8x32xf32>
    %57 = tpu.matmul %54, %56, %cst_68 {dimension_numbers = #tpu.dot_dimension_numbers<[1], [0], [0], [1], [0, 0, 1, 1], [], []>} : vector<8x32xbf16>, vector<32x32xbf16>, vector<8x32xf32> -> vector<8x32xf32>
    %58 = arith.addf %52, %57 : vector<8x32xf32>
    %c0_69 = arith.constant 0 : index
    %c10 = arith.constant 10 : index
    %c0_70 = arith.constant 0 : index
    %c0_71 = arith.constant 0 : index
    %59 = vector.load %arg2[%c0_69, %c10, %c0_70, %c0_71] : memref<1x12x8x32xbf16, #tpu.memory_space<vmem>>, vector<1x1x8x32xbf16>
    %60 = vector.shape_cast %59 : vector<1x1x8x32xbf16> to vector<8x32xbf16>
    %c10_72 = arith.constant 10 : index
    %c0_73 = arith.constant 0 : index
    %c0_74 = arith.constant 0 : index
    %61 = vector.load %arg3[%c10_72, %c0_73, %c0_74] : memref<12x32x32xbf16, #tpu.memory_space<vmem>>, vector<1x32x32xbf16>
    %62 = vector.shape_cast %61 : vector<1x32x32xbf16> to vector<32x32xbf16>
    %cst_75 = arith.constant dense<0.000000e+00> : vector<8x32xf32>
    %63 = tpu.matmul %60, %62, %cst_75 {dimension_numbers = #tpu.dot_dimension_numbers<[1], [0], [0], [1], [0, 0, 1, 1], [], []>} : vector<8x32xbf16>, vector<32x32xbf16>, vector<8x32xf32> -> vector<8x32xf32>
    %64 = arith.addf %58, %63 : vector<8x32xf32>
    %c0_76 = arith.constant 0 : index
    %c11 = arith.constant 11 : index
    %c0_77 = arith.constant 0 : index
    %c0_78 = arith.constant 0 : index
    %65 = vector.load %arg2[%c0_76, %c11, %c0_77, %c0_78] : memref<1x12x8x32xbf16, #tpu.memory_space<vmem>>, vector<1x1x8x32xbf16>
    %66 = vector.shape_cast %65 : vector<1x1x8x32xbf16> to vector<8x32xbf16>
    %c11_79 = arith.constant 11 : index
    %c0_80 = arith.constant 0 : index
    %c0_81 = arith.constant 0 : index
    %67 = vector.load %arg3[%c11_79, %c0_80, %c0_81] : memref<12x32x32xbf16, #tpu.memory_space<vmem>>, vector<1x32x32xbf16>
    %68 = vector.shape_cast %67 : vector<1x32x32xbf16> to vector<32x32xbf16>
    %cst_82 = arith.constant dense<0.000000e+00> : vector<8x32xf32>
    %69 = tpu.matmul %66, %68, %cst_82 {dimension_numbers = #tpu.dot_dimension_numbers<[1], [0], [0], [1], [0, 0, 1, 1], [], []>} : vector<8x32xbf16>, vector<32x32xbf16>, vector<8x32xf32> -> vector<8x32xf32>
    %70 = arith.addf %64, %69 : vector<8x32xf32>
    %c0_83 = arith.constant 0 : index
    %c0_84 = arith.constant 0 : index
    %71 = vector.load %arg4[%c0_83, %c0_84] : memref<1x32xf32, #tpu.memory_space<vmem>>, vector<1x32xf32>
    %72 = vector.broadcast %71 : vector<1x32xf32> to vector<8x32xf32>
    %73 = arith.addf %70, %72 : vector<8x32xf32>
    %cst_85 = arith.constant 0.000000e+00 : f32
    %74 = vector.broadcast %cst_85 : f32 to vector<8x32xf32>
    %75 = arith.maximumf %73, %74 : vector<8x32xf32>
    %76 = arith.truncf %75 : vector<8x32xf32> to vector<8x32xbf16>
    %c0_86 = arith.constant 0 : index
    %c0_87 = arith.constant 0 : index
    %77 = vector.load %arg5[%c0_86, %c0_87] : memref<32x10xbf16, #tpu.memory_space<vmem>>, vector<32x10xbf16>
    %cst_88 = arith.constant dense<0.000000e+00> : vector<8x10xf32>
    %78 = tpu.matmul %76, %77, %cst_88 {dimension_numbers = #tpu.dot_dimension_numbers<[1], [0], [0], [1], [0, 0, 1, 1], [], []>} : vector<8x32xbf16>, vector<32x10xbf16>, vector<8x10xf32> -> vector<8x10xf32>
    %c0_89 = arith.constant 0 : index
    %c0_90 = arith.constant 0 : index
    %79 = vector.load %arg6[%c0_89, %c0_90] : memref<1x10xf32, #tpu.memory_space<vmem>>, vector<1x10xf32>
    %80 = vector.broadcast %79 : vector<1x10xf32> to vector<8x10xf32>
    %81 = arith.addf %78, %80 : vector<8x10xf32>
    %cst_91 = arith.constant dense<0xFF800000> : vector<8xf32>
    %82 = vector.multi_reduction <maximumf>, %81, %cst_91 [1] : vector<8x10xf32> to vector<8xf32>
    %83 = vector.shape_cast %82 : vector<8xf32> to vector<8x1xf32>
    %84 = vector.broadcast %83 : vector<8x1xf32> to vector<8x10xf32>
    %85 = arith.subf %81, %84 : vector<8x10xf32>
    %86 = math.exp %85 : vector<8x10xf32>
    %cst_92 = arith.constant dense<0.000000e+00> : vector<8xf32>
    %87 = vector.multi_reduction <add>, %86, %cst_92 [1] : vector<8x10xf32> to vector<8xf32>
    %88 = vector.shape_cast %87 : vector<8xf32> to vector<8x1xf32>
    %89 = math.log %88 : vector<8x1xf32>
    %90 = vector.broadcast %89 : vector<8x1xf32> to vector<8x10xf32>
    %91 = arith.subf %85, %90 : vector<8x10xf32>
    %c0_93 = arith.constant 0 : index
    %c0_94 = arith.constant 0 : index
    %c0_95 = arith.constant 0 : index
    %92 = vector.load %arg9[%c0_93, %c0_94, %c0_95] : memref<1x8x10xf32, #tpu.memory_space<vmem>>, vector<1x8x10xf32>
    %93 = vector.shape_cast %92 : vector<1x8x10xf32> to vector<8x10xf32>
    %94 = vector.shape_cast %91 : vector<8x10xf32> to vector<1x8x10xf32>
    tpu.vector_store %arg9[%c0_93, %c0_94, %c0_95], %94 {strides = array<i32>} : memref<1x8x10xf32, #tpu.memory_space<vmem>>, vector<1x8x10xf32>,
    %c0_96 = arith.constant 0 : index
    %c0_97 = arith.constant 0 : index
    %c0_98 = arith.constant 0 : index
    %95 = vector.load %arg7[%c0_96, %c0_97, %c0_98] : memref<1x8x1xi32, #tpu.memory_space<vmem>>, vector<1x8x1xi32>
    %96 = vector.shape_cast %95 : vector<1x8x1xi32> to vector<8x1xi32>
    %c0_99 = arith.constant 0 : index
    %c0_100 = arith.constant 0 : index
    %c0_101 = arith.constant 0 : index
    %97 = vector.load %arg8[%c0_99, %c0_100, %c0_101] : memref<1x8x1xf32, #tpu.memory_space<vmem>>, vector<1x8x1xf32>
    %98 = vector.shape_cast %97 : vector<1x8x1xf32> to vector<8x1xf32>
    %cst_102 = arith.constant 0.000000e+00 : f32
    %99 = vector.broadcast %cst_102 : f32 to vector<8x1xf32>
    %100 = arith.cmpf ogt, %98, %99 : vector<8x1xf32>
    %101 = tpu.iota {dimensions = array<i32: 1>} : vector<8x10xi32>
    %102 = vector.broadcast %96 : vector<8x1xi32> to vector<8x10xi32>
    %103 = arith.cmpi eq, %101, %102 : vector<8x10xi32>
    %104 = arith.extui %103 : vector<8x10xi1> to vector<8x10xi32>
    %105 = arith.sitofp %104 : vector<8x10xi32> to vector<8x10xf32>
    %106 = arith.mulf %91, %105 : vector<8x10xf32>
    %cst_103 = arith.constant dense<0.000000e+00> : vector<8xf32>
    %107 = vector.multi_reduction <add>, %106, %cst_103 [1] : vector<8x10xf32> to vector<8xf32>
    %108 = vector.shape_cast %107 : vector<8xf32> to vector<8x1xf32>
    %cst_104 = arith.constant 0.000000e+00 : f32
    %109 = vector.broadcast %cst_104 : f32 to vector<8x1xf32>
    %110 = arith.subf %109, %108 : vector<8x1xf32>
    %cst_105 = arith.constant 0.000000e+00 : f32
    %111 = vector.broadcast %cst_105 : f32 to vector<8x1xf32>
    %112 = arith.select %100, %110, %111 : vector<8x1xi1>, vector<8x1xf32>
    %cst_106 = arith.constant dense<0xFF800000> : vector<8xf32>
    %113 = vector.multi_reduction <maximumf>, %91, %cst_106 [1] : vector<8x10xf32> to vector<8xf32>
    %114 = vector.shape_cast %113 : vector<8xf32> to vector<8x1xf32>
    %115 = vector.broadcast %114 : vector<8x1xf32> to vector<8x10xf32>
    %116 = arith.cmpf oeq, %91, %115 : vector<8x10xf32>
    %c10_i32 = arith.constant 10 : i32
    %117 = vector.broadcast %c10_i32 : i32 to vector<8x10xi32>
    %118 = arith.select %116, %101, %117 : vector<8x10xi1>, vector<8x10xi32>
    %cst_107 = arith.constant dense<2147483647> : vector<8xi32>
    %119 = vector.multi_reduction <minsi>, %118, %cst_107 [1] : vector<8x10xi32> to vector<8xi32>
    %120 = vector.shape_cast %119 : vector<8xi32> to vector<8x1xi32>
    %121 = arith.cmpi eq, %120, %96 : vector<8x1xi32>
    %122 = arith.andi %121, %100 : vector<8x1xi1>
    %cst_108 = arith.constant 1.000000e+00 : f32
    %cst_109 = arith.constant 0.000000e+00 : f32
    %123 = vector.broadcast %cst_108 : f32 to vector<8x1xf32>
    %124 = vector.broadcast %cst_109 : f32 to vector<8x1xf32>
    %125 = arith.select %122, %123, %124 : vector<8x1xi1>, vector<8x1xf32>
    %cst_110 = arith.constant 1.000000e+00 : f32
    %126 = vector.broadcast %cst_110 : f32 to vector<1x1x128xf32>
    %127 = vector.shape_cast %112 : vector<8x1xf32> to vector<1x8x1xf32>
    %cst_111 = arith.constant dense<0.000000e+00> : vector<1xf32>
    %128 = vector.multi_reduction <add>, %127, %cst_111 [1, 2] : vector<1x8x1xf32> to vector<1xf32>
    %129 = vector.shape_cast %128 : vector<1xf32> to vector<1x1x1xf32>
    %130 = vector.extract %129[0, 0, 0] : f32 from vector<1x1x1xf32>
    %131 = vector.broadcast %130 : f32 to vector<1x1x128xf32>
    %132 = arith.mulf %126, %131 : vector<1x1x128xf32>
    %c0_112 = arith.constant 0 : index
    %c0_113 = arith.constant 0 : index
    %c0_114 = arith.constant 0 : index
    %133 = vector.load %arg10[%c0_112, %c0_113, %c0_114] : memref<1x1x128xf32, #tpu.memory_space<vmem>>, vector<1x1x128xf32>
    tpu.vector_store %arg10[%c0_112, %c0_113, %c0_114], %132 {strides = array<i32>} : memref<1x1x128xf32, #tpu.memory_space<vmem>>, vector<1x1x128xf32>,
    %134 = vector.shape_cast %125 : vector<8x1xf32> to vector<1x8x1xf32>
    %cst_115 = arith.constant dense<0.000000e+00> : vector<1xf32>
    %135 = vector.multi_reduction <add>, %134, %cst_115 [1, 2] : vector<1x8x1xf32> to vector<1xf32>
    %136 = vector.shape_cast %135 : vector<1xf32> to vector<1x1x1xf32>
    %137 = vector.extract %136[0, 0, 0] : f32 from vector<1x1x1xf32>
    %138 = vector.broadcast %137 : f32 to vector<1x1x128xf32>
    %139 = arith.mulf %126, %138 : vector<1x1x128xf32>
    %c0_116 = arith.constant 0 : index
    %c0_117 = arith.constant 0 : index
    %c0_118 = arith.constant 0 : index
    %140 = vector.load %arg11[%c0_116, %c0_117, %c0_118] : memref<1x1x128xf32, #tpu.memory_space<vmem>>, vector<1x1x128xf32>
    tpu.vector_store %arg11[%c0_116, %c0_117, %c0_118], %139 {strides = array<i32>} : memref<1x1x128xf32, #tpu.memory_space<vmem>>, vector<1x1x128xf32>,
    return
  }
  func.func @transform_0(%arg0: i32, %arg1: i32) -> (i32, i32, i32, i32) {
    %c0_i32 = arith.constant 0 : i32
    %c0_i32_0 = arith.constant 0 : i32
    %c0_i32_1 = arith.constant 0 : i32
    return %arg0, %c0_i32, %arg1, %c0_i32_0 : i32, i32, i32, i32
  }
  func.func @transform_1(%arg0: i32, %arg1: i32) -> (i32, i32, i32) {
    %c0_i32 = arith.constant 0 : i32
    %c0_i32_0 = arith.constant 0 : i32
    %c0_i32_1 = arith.constant 0 : i32
    %c0_i32_2 = arith.constant 0 : i32
    return %c0_i32, %c0_i32_0, %c0_i32_1 : i32, i32, i32
  }
  func.func @transform_2(%arg0: i32, %arg1: i32) -> (i32, i32) {
    %c0_i32 = arith.constant 0 : i32
    %c0_i32_0 = arith.constant 0 : i32
    %c0_i32_1 = arith.constant 0 : i32
    return %c0_i32, %c0_i32_0 : i32, i32
  }
  func.func @transform_3(%arg0: i32, %arg1: i32) -> (i32, i32) {
    %c0_i32 = arith.constant 0 : i32
    %c0_i32_0 = arith.constant 0 : i32
    %c0_i32_1 = arith.constant 0 : i32
    return %c0_i32, %c0_i32_0 : i32, i32
  }
  func.func @transform_4(%arg0: i32, %arg1: i32) -> (i32, i32) {
    %c0_i32 = arith.constant 0 : i32
    %c0_i32_0 = arith.constant 0 : i32
    %c0_i32_1 = arith.constant 0 : i32
    return %c0_i32, %c0_i32_0 : i32, i32
  }
  func.func @transform_5(%arg0: i32, %arg1: i32) -> (i32, i32, i32) {
    %c0_i32 = arith.constant 0 : i32
    %c0_i32_0 = arith.constant 0 : i32
    return %arg0, %arg1, %c0_i32 : i32, i32, i32
  }
  func.func @transform_6(%arg0: i32, %arg1: i32) -> (i32, i32, i32) {
    %c0_i32 = arith.constant 0 : i32
    %c0_i32_0 = arith.constant 0 : i32
    return %arg0, %arg1, %c0_i32 : i32, i32, i32
  }
  func.func @transform_7(%arg0: i32, %arg1: i32) -> (i32, i32, i32) {
    %c0_i32 = arith.constant 0 : i32
    %c0_i32_0 = arith.constant 0 : i32
    return %arg0, %arg1, %c0_i32 : i32, i32, i32
  }
  func.func @transform_8(%arg0: i32, %arg1: i32) -> (i32, i32, i32) {
    %c0_i32 = arith.constant 0 : i32
    %c0_i32_0 = arith.constant 0 : i32
    return %arg0, %arg1, %c0_i32 : i32, i32, i32
  }
  func.func @transform_9(%arg0: i32, %arg1: i32) -> (i32, i32, i32) {
    %c0_i32 = arith.constant 0 : i32
    %c0_i32_0 = arith.constant 0 : i32
    return %arg0, %arg1, %c0_i32 : i32, i32, i32
  }
}

</mosaic_0001>

<llo_original>
// kernel: tpu_custom_call.1
$region0: #{tpu_custom_call.1}
  #allocation0 [shape = 'u32[]', space=smem, size = 0x4, offset = 0x4, fixed_abs, tag = 'smem constant byte address 0x4 - core index']
  #allocation1 [shape = 'u32[144,128]{1,0:T(1,128)}', space=vmem, size = 0x12000, scoped, tag = 'internal scratch']
  %s0 = inlined_call_operand.hbm [shape: bf16[2,12,8,32], index: 0, kind: input, shape index: {}]
  %s1 = inlined_call_operand.hbm [shape: bf16[12,32,32], index: 1, kind: input, shape index: {}]
  %s2 = inlined_call_operand.vmem [shape: f32[1,32], index: 2, kind: input, shape index: {}]
  %s3 = inlined_call_operand.vmem [shape: bf16[32,10], index: 3, kind: input, shape index: {}]
  %s4 = inlined_call_operand.vmem [shape: f32[1,10], index: 4, kind: input, shape index: {}]
  %s5 = inlined_call_operand.vmem [shape: s32[2,8,1], index: 5, kind: input, shape index: {}]
  %s6 = inlined_call_operand.vmem [shape: f32[2,8,1], index: 6, kind: input, shape index: {}]
  %s7 = inlined_call_operand.hbm [shape: f32[2,8,10], index: 7, kind: output, shape index: {0}]
  %s8 = inlined_call_operand.hbm [shape: f32[2,1,128], index: 8, kind: output, shape index: {1}]
  %s9 = inlined_call_operand.hbm [shape: f32[2,1,128], index: 9, kind: output, shape index: {2}]
  %10 = xla_tuple %s7, %s8, %s9
  %s11 = sld [smem:[#allocation0]]
  $region85: #{tpu_custom_call.1} parent=0
    _
  %s13 = ssub.s32 1, %s11
  %s14 = scalar_select 0, %s13, %s11
  $region1: #{tpu_custom_call.1} parent=0
    #allocation2 [shape = 'u8[49152]{0}', space=vmem, size = 0xc000, scoped, tag = 'input window, operand 0']
    #allocation3 [shape = 's32[2]{0}', space=sflag, size = 0x8, scoped, tag = 'scoped memory for tpu_custom_call.1']
    #allocation4 [shape = 's32[2]{0}', space=sflag, size = 0x8, scoped, tag = 'scoped memory for tpu_custom_call.1']
    #allocation5 [shape = 'u8[98304]{0}', space=vmem, size = 0x18000, scoped, tag = 'input window, operand 1, single buffered']
    #allocation6 [shape = 's32[1]{0}', space=sflag, size = 0x4, scoped, tag = 'scoped memory for tpu_custom_call.1']
    #allocation7 [shape = 'u8[8192]{0}', space=vmem, size = 0x2000, scoped, tag = 'output window, operand 0']
    #allocation8 [shape = 'u8[1024]{0}', space=vmem, size = 0x400, scoped, tag = 'output window, operand 1']
    #allocation9 [shape = 's32[2]{0}', space=sflag, size = 0x8, scoped, tag = 'scoped memory for tpu_custom_call.1']
    #allocation10 [shape = 'u8[1024]{0}', space=vmem, size = 0x400, scoped, tag = 'output window, operand 2']
    %15 = vsyncpa [#allocation3], 0
    %s16 = scalar_lea.sflag [#allocation3], 1
    %17 = vsyncpa %s16, 0
    %18 = vsyncpa [#allocation6], 0
    %19 = vsyncpa [#allocation4], 0
    %s20 = scalar_lea.sflag [#allocation4], 1
    %21 = vsyncpa %s20, 0
    %22 = vsyncpa [#allocation9], 0
    %s23 = scalar_lea.sflag [#allocation9], 1
    %24 = vsyncpa %s23, 0
    loop: start=0, step=1, limit=4
    $region2: #{tpu_custom_call.1} parent=1 // loop_pre_header
      _
    $region3: #{tpu_custom_call.1} parent=1 // loop_header
      %s26 = sphi 0, %s30
      %p27 = scmp.ge.s32.totalorder %s26, 4
      %s33 = sphi 0, %s45
      %s34 = sphi 0, %s41
      %s35 = sphi 0, %s33
      %s36 = sphi 0, %s34
      %s37 = sphi 0, %s35
      %s38 = sphi 0, %s36
      %s50 = sphi 0, %s52
      %s53 = sphi 0, %s50
      %s54 = sphi 0, %s53
      %s70 = sphi 0, %s54
      %s74 = sphi 0, %s74
      %s76 = sphi 0, %s74
      %s77 = sphi 0, %s76
      %s91 = sphi 0, %s77
      %s95 = sphi 0, %s95
      %s97 = sphi 0, %s95
      %s98 = sphi 0, %s97
      %s112 = sphi 0, %s98
      %s116 = sphi 0, %s116
      %s118 = sphi 0, %s116
      %s119 = sphi 0, %s118
      %s133 = sphi 0, %s119
      %s137 = sphi 0, %s137
      %s139 = sphi 0, %s137
      %s140 = sphi 0, %s139
      %s154 = sphi 0, %s140
      %s162 = sphi 0, %s164
      %s165 = sphi 0, %s162
      %s166 = sphi 0, %s165
      %s182 = sphi 0, %s166
      %s190 = sphi 0, %s192
      %s193 = sphi 0, %s190
      %s194 = sphi 0, %s193
      %s210 = sphi 0, %s194
      %s218 = sphi 0, %s220
      %s221 = sphi 0, %s218
      %s222 = sphi 0, %s221
      %s238 = sphi 0, %s222
      %s246 = sphi 0, %s248
      %s249 = sphi 0, %s246
      %s250 = sphi 0, %s249
      %s266 = sphi 0, %s250
      %s274 = sphi 0, %s276
      %s277 = sphi 0, %s274
      %s278 = sphi 0, %s277
      %s294 = sphi 0, %s278
    $region4: #{tpu_custom_call.1} parent=1 // loop_header_branch
      %29 = sbr.rel (%p27) target = $region8
    $region5: #{tpu_custom_call.1} parent=1 // loop_body
      %s31 = ssub.s32 %s26, 1
      %s32 = ssub.s32 %s26, 2
      %s39 = sadd.s32 1, %s34
      %p40 = scmp.ge.s32.totalorder %s39, 1
      %s41 = scalar_select %p40, 0, %s39
      %s42 = sadd.s32 1, %s33
      %s43 = scalar_select %p40, %s42, %s33
      %p44 = scmp.ge.s32.totalorder %s43, 2
      %s45 = scalar_select %p44, 0, %s43
      %s46 = ssub.s32 %s33, %s45
      %s47 = ssub.s32 %s34, %s41
      %s48 = sor.u32 %s46, %s47
      %p49 = scmp.eq.s32.totalorder %s48, 0
      %s51 = sadd.s32 %s50, 1
      %s52 = scalar_select %p49, %s50, %s51
      %p55 = pneg %p49
      %p56 = scmp.eq.s32.totalorder %s26, 1
      %p57 = por %p55, %p56
      %p58 = scmp.ne.s32.totalorder %s50, %s53
      %p59 = scmp.eq.s32.totalorder %s26, 0
      %p60 = por %p58, %p59
      %p61 = scmp.ne.s32.totalorder %s50, %s53
      %p62 = scmp.eq.s32.totalorder %s31, 1
      %p63 = por %p61, %p62
      %p64 = scmp.ne.s32.totalorder %s53, %s54
      %p65 = scmp.eq.s32.totalorder %s31, 0
      %p66 = por %p64, %p65
      %p67 = scmp.ne.s32.totalorder %s53, %s54
      %p68 = scmp.eq.s32.totalorder %s32, 1
      %p69 = por %p67, %p68
      %p71 = scmp.ne.s32.totalorder %s54, %s70
      %p72 = scmp.eq.s32.totalorder %s32, 0
      %p73 = por %p71, %p72
      %s75 = sadd.s32 %s74, 1
      %p78 = scmp.eq.s32.totalorder %s26, 1
      %p79 = scmp.ne.s32.totalorder %s74, %s76
      %p80 = scmp.eq.s32.totalorder %s26, 0
      %p81 = por %p79, %p80
      %p82 = scmp.ne.s32.totalorder %s74, %s76
      %p83 = scmp.eq.s32.totalorder %s31, 1
      %p84 = por %p82, %p83
      %p85 = scmp.ne.s32.totalorder %s76, %s77
      %p86 = scmp.eq.s32.totalorder %s31, 0
      %p87 = por %p85, %p86
      %p88 = scmp.ne.s32.totalorder %s76, %s77
      %p89 = scmp.eq.s32.totalorder %s32, 1
      %p90 = por %p88, %p89
      %p92 = scmp.ne.s32.totalorder %s77, %s91
      %p93 = scmp.eq.s32.totalorder %s32, 0
      %p94 = por %p92, %p93
      %s96 = sadd.s32 %s95, 1
      %p99 = scmp.eq.s32.totalorder %s26, 1
      %p100 = scmp.ne.s32.totalorder %s95, %s97
      %p101 = scmp.eq.s32.totalorder %s26, 0
      %p102 = por %p100, %p101
      %p103 = scmp.ne.s32.totalorder %s95, %s97
      %p104 = scmp.eq.s32.totalorder %s31, 1
      %p105 = por %p103, %p104
      %p106 = scmp.ne.s32.totalorder %s97, %s98
      %p107 = scmp.eq.s32.totalorder %s31, 0
      %p108 = por %p106, %p107
      %p109 = scmp.ne.s32.totalorder %s97, %s98
      %p110 = scmp.eq.s32.totalorder %s32, 1
      %p111 = por %p109, %p110
      %p113 = scmp.ne.s32.totalorder %s98, %s112
      %p114 = scmp.eq.s32.totalorder %s32, 0
      %p115 = por %p113, %p114
      %s117 = sadd.s32 %s116, 1
      %p120 = scmp.eq.s32.totalorder %s26, 1
      %p121 = scmp.ne.s32.totalorder %s116, %s118
      %p122 = scmp.eq.s32.totalorder %s26, 0
      %p123 = por %p121, %p122
      %p124 = scmp.ne.s32.totalorder %s116, %s118
      %p125 = scmp.eq.s32.totalorder %s31, 1
      %p126 = por %p124, %p125
      %p127 = scmp.ne.s32.totalorder %s118, %s119
      %p128 = scmp.eq.s32.totalorder %s31, 0
      %p129 = por %p127, %p128
      %p130 = scmp.ne.s32.totalorder %s118, %s119
      %p131 = scmp.eq.s32.totalorder %s32, 1
      %p132 = por %p130, %p131
      %p134 = scmp.ne.s32.totalorder %s119, %s133
      %p135 = scmp.eq.s32.totalorder %s32, 0
      %p136 = por %p134, %p135
      %s138 = sadd.s32 %s137, 1
      %p141 = scmp.eq.s32.totalorder %s26, 1
      %p142 = scmp.ne.s32.totalorder %s137, %s139
      %p143 = scmp.eq.s32.totalorder %s26, 0
      %p144 = por %p142, %p143
      %p145 = scmp.ne.s32.totalorder %s137, %s139
      %p146 = scmp.eq.s32.totalorder %s31, 1
      %p147 = por %p145, %p146
      %p148 = scmp.ne.s32.totalorder %s139, %s140
      %p149 = scmp.eq.s32.totalorder %s31, 0
      %p150 = por %p148, %p149
      %p151 = scmp.ne.s32.totalorder %s139, %s140
      %p152 = scmp.eq.s32.totalorder %s32, 1
      %p153 = por %p151, %p152
      %p155 = scmp.ne.s32.totalorder %s140, %s154
      %p156 = scmp.eq.s32.totalorder %s32, 0
      %p157 = por %p155, %p156
      %s158 = ssub.s32 %s33, %s45
      %s159 = ssub.s32 %s34, %s41
      %s160 = sor.u32 %s158, %s159
      %p161 = scmp.eq.s32.totalorder %s160, 0
      %s163 = sadd.s32 %s162, 1
      %s164 = scalar_select %p161, %s162, %s163
      %p167 = pneg %p161
      %p168 = scmp.eq.s32.totalorder %s26, 1
      %p169 = por %p167, %p168
      %p170 = scmp.ne.s32.totalorder %s162, %s165
      %p171 = scmp.eq.s32.totalorder %s26, 0
      %p172 = por %p170, %p171
      %p173 = scmp.ne.s32.totalorder %s162, %s165
      %p174 = scmp.eq.s32.totalorder %s31, 1
      %p175 = por %p173, %p174
      %p176 = scmp.ne.s32.totalorder %s165, %s166
      %p177 = scmp.eq.s32.totalorder %s31, 0
      %p178 = por %p176, %p177
      %p179 = scmp.ne.s32.totalorder %s165, %s166
      %p180 = scmp.eq.s32.totalorder %s32, 1
      %p181 = por %p179, %p180
      %p183 = scmp.ne.s32.totalorder %s166, %s182
      %p184 = scmp.eq.s32.totalorder %s32, 0
      %p185 = por %p183, %p184
      %s186 = ssub.s32 %s33, %s45
      %s187 = ssub.s32 %s34, %s41
      %s188 = sor.u32 %s186, %s187
      %p189 = scmp.eq.s32.totalorder %s188, 0
      %s191 = sadd.s32 %s190, 1
      %s192 = scalar_select %p189, %s190, %s191
      %p195 = pneg %p189
      %p196 = scmp.eq.s32.totalorder %s26, 1
      %p197 = por %p195, %p196
      %p198 = scmp.ne.s32.totalorder %s190, %s193
      %p199 = scmp.eq.s32.totalorder %s26, 0
      %p200 = por %p198, %p199
      %p201 = scmp.ne.s32.totalorder %s190, %s193
      %p202 = scmp.eq.s32.totalorder %s31, 1
      %p203 = por %p201, %p202
      %p204 = scmp.ne.s32.totalorder %s193, %s194
      %p205 = scmp.eq.s32.totalorder %s31, 0
      %p206 = por %p204, %p205
      %p207 = scmp.ne.s32.totalorder %s193, %s194
      %p208 = scmp.eq.s32.totalorder %s32, 1
      %p209 = por %p207, %p208
      %p211 = scmp.ne.s32.totalorder %s194, %s210
      %p212 = scmp.eq.s32.totalorder %s32, 0
      %p213 = por %p211, %p212
      %s214 = ssub.s32 %s33, %s45
      %s215 = ssub.s32 %s34, %s41
      %s216 = sor.u32 %s214, %s215
      %p217 = scmp.eq.s32.totalorder %s216, 0
      %s219 = sadd.s32 %s218, 1
      %s220 = scalar_select %p217, %s218, %s219
      %p223 = pneg %p217
      %p224 = scmp.eq.s32.totalorder %s26, 1
      %p225 = por %p223, %p224
      %p226 = scmp.ne.s32.totalorder %s218, %s221
      %p227 = scmp.eq.s32.totalorder %s26, 0
      %p228 = por %p226, %p227
      %p229 = scmp.ne.s32.totalorder %s218, %s221
      %p230 = scmp.eq.s32.totalorder %s31, 1
      %p231 = por %p229, %p230
      %p232 = scmp.ne.s32.totalorder %s221, %s222
      %p233 = scmp.eq.s32.totalorder %s31, 0
      %p234 = por %p232, %p233
      %p235 = scmp.ne.s32.totalorder %s221, %s222
      %p236 = scmp.eq.s32.totalorder %s32, 1
      %p237 = por %p235, %p236
      %p239 = scmp.ne.s32.totalorder %s222, %s238
      %p240 = scmp.eq.s32.totalorder %s32, 0
      %p241 = por %p239, %p240
      %s242 = ssub.s32 %s33, %s45
      %s243 = ssub.s32 %s34, %s41
      %s244 = sor.u32 %s242, %s243
      %p245 = scmp.eq.s32.totalorder %s244, 0
      %s247 = sadd.s32 %s246, 1
      %s248 = scalar_select %p245, %s246, %s247
      %p251 = pneg %p245
      %p252 = scmp.eq.s32.totalorder %s26, 1
      %p253 = por %p251, %p252
      %p254 = scmp.ne.s32.totalorder %s246, %s249
      %p255 = scmp.eq.s32.totalorder %s26, 0
      %p256 = por %p254, %p255
      %p257 = scmp.ne.s32.totalorder %s246, %s249
      %p258 = scmp.eq.s32.totalorder %s31, 1
      %p259 = por %p257, %p258
      %p260 = scmp.ne.s32.totalorder %s249, %s250
      %p261 = scmp.eq.s32.totalorder %s31, 0
      %p262 = por %p260, %p261
      %p263 = scmp.ne.s32.totalorder %s249, %s250
      %p264 = scmp.eq.s32.totalorder %s32, 1
      %p265 = por %p263, %p264
      %p267 = scmp.ne.s32.totalorder %s250, %s266
      %p268 = scmp.eq.s32.totalorder %s32, 0
      %p269 = por %p267, %p268
      %s270 = ssub.s32 %s33, %s45
      %s271 = ssub.s32 %s34, %s41
      %s272 = sor.u32 %s270, %s271
      %p273 = scmp.eq.s32.totalorder %s272, 0
      %s275 = sadd.s32 %s274, 1
      %s276 = scalar_select %p273, %s274, %s275
      %p279 = pneg %p273
      %p280 = scmp.eq.s32.totalorder %s26, 1
      %p281 = por %p279, %p280
      %p282 = scmp.ne.s32.totalorder %s274, %s277
      %p283 = scmp.eq.s32.totalorder %s26, 0
      %p284 = por %p282, %p283
      %p285 = scmp.ne.s32.totalorder %s274, %s277
      %p286 = scmp.eq.s32.totalorder %s31, 1
      %p287 = por %p285, %p286
      %p288 = scmp.ne.s32.totalorder %s277, %s278
      %p289 = scmp.eq.s32.totalorder %s31, 0
      %p290 = por %p288, %p289
      %p291 = scmp.ne.s32.totalorder %s277, %s278
      %p292 = scmp.eq.s32.totalorder %s32, 1
      %p293 = por %p291, %p292
      %p295 = scmp.ne.s32.totalorder %s278, %s294
      %p296 = scmp.eq.s32.totalorder %s32, 0
      %p297 = por %p295, %p296
      %p298 = scmp.le.s32.totalorder 1, %s26
      %p299 = scmp.lt.s32.totalorder %s26, 3
      %p300 = pnand %p298, %p299
      %p301 = pneg %p300
      // Predicated region
      $region9: #{tpu_custom_call.1} parent=5 // pred_check
        _
      $region10: #{tpu_custom_call.1} parent=5 // pred_check_branch
        %303 = sbr.rel (%p300) target = $region12
      $region11: #{tpu_custom_call.1} parent=5 // pred_region
        %s304 = ssub.s32 %s26, 1
        // Predicated region
        $region13: #{tpu_custom_call.1} parent=11 // pred_check
          %p305 = pneg %p87
        $region14: #{tpu_custom_call.1} parent=11 // pred_check_branch
          %307 = sbr.rel (%p305) target = $region16
        $region15: #{tpu_custom_call.1} parent=11 // pred_region
          %s309 = ssub.s32 3072, 3072
          %310 = vsyncadd [#allocation6], %s309
          %s311 = sshll.u32 [#allocation5], 4
          %s312 = int_to_ptr.vmem [resolvable:$true] %s311
          %317 = dma.hbm_to_vmem [thread:$0]  %s1, 3072, %s312, [#allocation6], 64, 64, 4
        $region16: #{tpu_custom_call.1} parent=11 // pred_fallthru
          _
        // Predicated region
        $region17: #{tpu_custom_call.1} parent=11 // pred_check
          %p318 = pneg %p108
        $region18: #{tpu_custom_call.1} parent=11 // pred_check_branch
          %320 = sbr.rel (%p318) target = $region20
        $region19: #{tpu_custom_call.1} parent=11 // pred_region
          _
        $region20: #{tpu_custom_call.1} parent=11 // pred_fallthru
          _
        // Predicated region
        $region21: #{tpu_custom_call.1} parent=11 // pred_check
          %p321 = pneg %p129
        $region22: #{tpu_custom_call.1} parent=11 // pred_check_branch
          %323 = sbr.rel (%p321) target = $region24
        $region23: #{tpu_custom_call.1} parent=11 // pred_region
          _
        $region24: #{tpu_custom_call.1} parent=11 // pred_fallthru
          _
        // Predicated region
        $region25: #{tpu_custom_call.1} parent=11 // pred_check
          %p324 = pneg %p150
        $region26: #{tpu_custom_call.1} parent=11 // pred_check_branch
          %326 = sbr.rel (%p324) target = $region28
        $region27: #{tpu_custom_call.1} parent=11 // pred_region
          _
        $region28: #{tpu_custom_call.1} parent=11 // pred_fallthru
          _
      $region12: #{tpu_custom_call.1} parent=5 // pred_fallthru
        _
      %p327 = scmp.lt.s32.totalorder %s26, 2
      // Predicated region
      $region29: #{tpu_custom_call.1} parent=5 // pred_check
        %p328 = pneg %p327
      $region30: #{tpu_custom_call.1} parent=5 // pred_check_branch
        %330 = sbr.rel (%p328) target = $region32
      $region31: #{tpu_custom_call.1} parent=5 // pred_region
        // Predicated region
        $region33: #{tpu_custom_call.1} parent=31 // pred_check
          %p331 = pneg %p60
        $region34: #{tpu_custom_call.1} parent=31 // pred_check_branch
          %333 = sbr.rel (%p331) target = $region36
        $region35: #{tpu_custom_call.1} parent=31 // pred_region
          %s334 = sand.u32 %s50, 1
          %s335 = scalar_lea.sflag [#allocation3], %s334
          %s336 = sand.u32 %s50, 1
          %s337 = smul.addr %s336, 48
          %s338 = scalar_lea.vmem [#allocation2], %s337
          %s340 = ssub.s32 768, 768
          %341 = vsyncadd %s335, %s340
          %s342 = smul.addr %s33, 12
          %s343 = sadd.s32 %s34, %s342
          %s344 = smul.addr %s343, 64
          %s345 = scalar_lea.hbm %s0, %s344
          %s346 = sshll.u32 %s338, 4
          %s347 = int_to_ptr.vmem [resolvable:$true] %s346
          %352 = dma.hbm_to_vmem [thread:$0]  %s345, 768, %s347, %s335, 64, 64, 4
        $region36: #{tpu_custom_call.1} parent=31 // pred_fallthru
          _
        // Predicated region
        $region37: #{tpu_custom_call.1} parent=31 // pred_check
          %p353 = pneg %p172
        $region38: #{tpu_custom_call.1} parent=31 // pred_check_branch
          %355 = sbr.rel (%p353) target = $region40
        $region39: #{tpu_custom_call.1} parent=31 // pred_region
          %p356 = scmp.lt.s32.totalorder %s33, 1
          %s357 = scalar_select %p356, %s33, 1
          %p358 = scmp.lt.s32.totalorder %s34, 0
          %s359 = scalar_select %p358, %s34, 0
          %s360 = sadd.s32 %s359, %s357
          %s361 = smul.addr %s360, 8
          %s362 = scalar_lea.vmem %s5, %s361
        $region40: #{tpu_custom_call.1} parent=31 // pred_fallthru
          _
        // Predicated region
        $region41: #{tpu_custom_call.1} parent=31 // pred_check
          %p363 = pneg %p200
        $region42: #{tpu_custom_call.1} parent=31 // pred_check_branch
          %365 = sbr.rel (%p363) target = $region44
        $region43: #{tpu_custom_call.1} parent=31 // pred_region
          %p366 = scmp.lt.s32.totalorder %s33, 1
          %s367 = scalar_select %p366, %s33, 1
          %p368 = scmp.lt.s32.totalorder %s34, 0
          %s369 = scalar_select %p368, %s34, 0
          %s370 = sadd.s32 %s369, %s367
          %s371 = smul.addr %s370, 8
          %s372 = scalar_lea.vmem %s6, %s371
        $region44: #{tpu_custom_call.1} parent=31 // pred_fallthru
          _
      $region32: #{tpu_custom_call.1} parent=5 // pred_fallthru
        _
      %p373 = scmp.le.s32.totalorder 1, %s26
      %p374 = scmp.lt.s32.totalorder %s26, 3
      %p375 = pnand %p373, %p374
      %p376 = pneg %p375
      // Predicated region
      $region45: #{tpu_custom_call.1} parent=5 // pred_check
        _
      $region46: #{tpu_custom_call.1} parent=5 // pred_check_branch
        %378 = sbr.rel (%p375) target = $region48
      $region47: #{tpu_custom_call.1} parent=5 // pred_region
        %s379 = ssub.s32 %s26, 1
        %s380 = sand.u32 %s53, 1
        %s381 = scalar_lea.sflag [#allocation3], %s380
        %s382 = sand.u32 %s53, 1
        %s383 = smul.addr %s382, 48
        %s384 = scalar_lea.vmem [#allocation2], %s383
        // Predicated region
        $region49: #{tpu_custom_call.1} parent=47 // pred_check
          %p385 = pneg %p66
        $region50: #{tpu_custom_call.1} parent=47 // pred_check_branch
          %387 = sbr.rel (%p385) target = $region52
        $region51: #{tpu_custom_call.1} parent=47 // pred_region
          %388 = dma.done %s381, 768
        $region52: #{tpu_custom_call.1} parent=47 // pred_fallthru
          _
        // Predicated region
        $region53: #{tpu_custom_call.1} parent=47 // pred_check
          %p389 = pneg %p87
        $region54: #{tpu_custom_call.1} parent=47 // pred_check_branch
          %391 = sbr.rel (%p389) target = $region56
        $region55: #{tpu_custom_call.1} parent=47 // pred_region
          %392 = dma.done [#allocation6], 3072
        $region56: #{tpu_custom_call.1} parent=47 // pred_fallthru
          _
        %s393 = sand.u32 %s53, 1
        %s394 = scalar_lea.sflag [#allocation3], %s393
        %s395 = sand.u32 %s53, 1
        %s396 = smul.addr %s395, 48
        %s397 = scalar_lea.vmem [#allocation2], %s396
        %p398 = pneg %p66
        %p399 = pneg %p63
        %p400 = pneg %p87
        %p401 = pneg %p84
        %p402 = pneg %p108
        %p403 = pneg %p105
        %p404 = pneg %p129
        %p405 = pneg %p126
        %p406 = pneg %p150
        %p407 = pneg %p147
        %p408 = scmp.lt.s32.totalorder %s35, 1
        %s409 = scalar_select %p408, %s35, 1
        %p410 = scmp.lt.s32.totalorder %s36, 0
        %s411 = scalar_select %p410, %s36, 0
        %s412 = sadd.s32 %s411, %s409
        %s413 = smul.addr %s412, 8
        %s414 = scalar_lea.vmem %s5, %s413
        %p415 = pneg %p178
        %p416 = pneg %p175
        %p417 = scmp.lt.s32.totalorder %s35, 1
        %s418 = scalar_select %p417, %s35, 1
        %p419 = scmp.lt.s32.totalorder %s36, 0
        %s420 = scalar_select %p419, %s36, 0
        %s421 = sadd.s32 %s420, %s418
        %s422 = smul.addr %s421, 8
        %s423 = scalar_lea.vmem %s6, %s422
        %p424 = pneg %p206
        %p425 = pneg %p203
        %p426 = pneg %p234
        %p427 = pneg %p231
        %s428 = sand.u32 %s221, 1
        %s429 = scalar_lea.sflag [#allocation4], %s428
        %s430 = sand.u32 %s221, 1
        %s431 = smul.addr %s430, 8
        %s432 = scalar_lea.vmem [#allocation7], %s431
        %p433 = pneg %p262
        %p434 = pneg %p259
        %s435 = sand.u32 %s31, 1
        %s436 = scalar_lea.sflag [#allocation9], %s435
        %s437 = sand.u32 %s249, 1
        %s438 = scalar_lea.vmem [#allocation8], %s437
        %p439 = pneg %p290
        %p440 = pneg %p287
        %s441 = sand.u32 %s31, 1
        %s442 = scalar_lea.sflag [#allocation9], %s441
        %s443 = sand.u32 %s277, 1
        %s444 = scalar_lea.vmem [#allocation10], %s443
        %p445 = scmp.lt.s32.totalorder %s35, 1
        %s446 = scalar_select %p445, %s35, 1
        %p447 = scmp.lt.s32.totalorder %s36, 0
        %s448 = scalar_select %p447, %s36, 0
        %s449 = sadd.s32 %s448, %s446
        %s450 = smul.addr %s449, 8
        %s451 = scalar_lea.vmem %s5, %s450
        %p452 = scmp.lt.s32.totalorder %s35, 1
        %s453 = scalar_select %p452, %s35, 1
        %p454 = scmp.lt.s32.totalorder %s36, 0
        %s455 = scalar_select %p454, %s36, 0
        %s456 = sadd.s32 %s455, %s453
        %s457 = smul.addr %s456, 8
        %s458 = scalar_lea.vmem %s6, %s457
        %v460 = vld [vmem:[%s384] sm:$0xf]
        %v461 = vld [vmem:[#allocation5] sm:$0xf]
        %v462 = vld [vmem:[#allocation5 + $0x4] sm:$0xf]
        %v463 = vld [vmem:[#allocation5 + $0x8] sm:$0xf]
        %v464 = vld [vmem:[#allocation5 + $0xc] sm:$0xf]
        %s465 = scalar_lea.vmem %s384, 4 [#allocation2]
        %v466 = vld [vmem:[%s465] sm:$0xf]
        %s467 = scalar_lea.vmem [#allocation5], 16
        %v468 = vld [vmem:[%s467] sm:$0xf]
        %v469 = vld [vmem:[%s467 + $0x4] sm:$0xf]
        %v470 = vld [vmem:[%s467 + $0x8] sm:$0xf]
        %v471 = vld [vmem:[%s467 + $0xc] sm:$0xf]
        %v476 = vunpack.c.l.b16 %v468
        %v477 = vunpack.c.l.b16 %v469
        %v478 = vunpack.c.l.b16 %v470
        %v479 = vunpack.c.l.b16 %v471
        %v480 = vpack.c.b16 %v477, %v476
        %v481 = vpack.c.b16 %v479, %v478
        %vm484 = vcmask 261120
        %v486 = vsel %vm484, %v466, 0
        %488 = vmatprep.subr.bf16.mxu0 0
        %489 = vmatpush1.bf16.msra.mxu0 0
        %490 = vmatprep.subr.bf16.mxu0 0
        %491 = vmatpush1.bf16.msra.mxu0 0
        %492 = vmatprep.subr.bf16.mxu0 0
        %493 = vmatpush1.bf16.msra.mxu0 0
        %494 = vmatprep.subr.bf16.mxu0 0
        %495 = vmatpush1.bf16.msra.mxu0 0
        %496 = vmatprep.subr.bf16.mxu0 0
        %497 = vmatpush1.bf16.msra.mxu0 0
        %498 = vmatprep.subr.bf16.mxu0 0
        %499 = vmatpush1.bf16.msra.mxu0 0
        %500 = vmatprep.subr.bf16.mxu0 0
        %501 = vmatpush1.bf16.msra.mxu0 %v481
        %502 = vmatprep.subr.bf16.mxu0 0
        %503 = vmatpush1.bf16.msra.mxu0 %v480
        %504 = vmatprep.subr.bf16.mxu0 0
        %505 = vmatpush2.bf16.msra.mxu0 0
        %506 = vmatprep.subr.bf16.mxu0 0
        %507 = vmatpush2.bf16.msra.mxu0 0
        %508 = vmatprep.subr.bf16.mxu0 0
        %509 = vmatpush2.bf16.msra.mxu0 0
        %510 = vmatprep.subr.bf16.mxu0 0
        %511 = vmatpush2.bf16.msra.mxu0 0
        %512 = vmatprep.subr.bf16.mxu0 0
        %513 = vmatpush2.bf16.msra.mxu0 0
        %514 = vmatprep.subr.bf16.mxu0 0
        %515 = vmatpush2.bf16.msra.mxu0 0
        %516 = vmatprep.subr.bf16.mxu0 0
        %517 = vmatpush2.bf16.msra.mxu0 0
        %518 = vmatprep.subr.bf16.mxu0 0
        %519 = vmatpush2.bf16.msra.mxu0 0
        %520 = vmatprep.mubr.bf16.mxu0 0
        %521 = vmatmul.mubr.bf16.gmra.mxu0 %v486
        %v522 = vpop.f32.mrf.mxu0
        %v523 = vadd.f32 0.0, %v522
        %v524 = vpop.f32.mrf.mxu0
        %v525 = vpop.f32.mrf.mxu0
        %v526 = vpop.f32.mrf.mxu0
        %527 = vdwg.mxu0
        %v532 = vunpack.c.l.b16 %v461
        %v533 = vunpack.c.l.b16 %v462
        %v534 = vunpack.c.l.b16 %v463
        %v535 = vunpack.c.l.b16 %v464
        %v536 = vpack.c.b16 %v533, %v532
        %v537 = vpack.c.b16 %v535, %v534
        %v541 = vsel %vm484, %v460, 0
        %543 = vmatprep.subr.bf16.mxu0 0
        %544 = vmatpush1.bf16.msra.mxu0 0
        %545 = vmatprep.subr.bf16.mxu0 0
        %546 = vmatpush1.bf16.msra.mxu0 0
        %547 = vmatprep.subr.bf16.mxu0 0
        %548 = vmatpush1.bf16.msra.mxu0 0
        %549 = vmatprep.subr.bf16.mxu0 0
        %550 = vmatpush1.bf16.msra.mxu0 0
        %551 = vmatprep.subr.bf16.mxu0 0
        %552 = vmatpush1.bf16.msra.mxu0 0
        %553 = vmatprep.subr.bf16.mxu0 0
        %554 = vmatpush1.bf16.msra.mxu0 0
        %555 = vmatprep.subr.bf16.mxu0 0
        %556 = vmatpush1.bf16.msra.mxu0 %v537
        %557 = vmatprep.subr.bf16.mxu0 0
        %558 = vmatpush1.bf16.msra.mxu0 %v536
        %559 = vmatprep.subr.bf16.mxu0 0
        %560 = vmatpush2.bf16.msra.mxu0 0
        %561 = vmatprep.subr.bf16.mxu0 0
        %562 = vmatpush2.bf16.msra.mxu0 0
        %563 = vmatprep.subr.bf16.mxu0 0
        %564 = vmatpush2.bf16.msra.mxu0 0
        %565 = vmatprep.subr.bf16.mxu0 0
        %566 = vmatpush2.bf16.msra.mxu0 0
        %567 = vmatprep.subr.bf16.mxu0 0
        %568 = vmatpush2.bf16.msra.mxu0 0
        %569 = vmatprep.subr.bf16.mxu0 0
        %570 = vmatpush2.bf16.msra.mxu0 0
        %571 = vmatprep.subr.bf16.mxu0 0
        %572 = vmatpush2.bf16.msra.mxu0 0
        %573 = vmatprep.subr.bf16.mxu0 0
        %574 = vmatpush2.bf16.msra.mxu0 0
        %575 = vmatprep.mubr.bf16.mxu0 0
        %576 = vmatmul.mubr.bf16.gmra.mxu0 %v541
        %v577 = vpop.f32.mrf.mxu0
        %v578 = vadd.f32 %v523, %v577
        %v579 = vpop.f32.mrf.mxu0
        %v580 = vpop.f32.mrf.mxu0
        %v581 = vpop.f32.mrf.mxu0
        %582 = vdwg.mxu0
        %s583 = scalar_lea.vmem %s384, 8 [#allocation2]
        %v584 = vld [vmem:[%s583] sm:$0xf]
        %s585 = scalar_lea.vmem [#allocation5], 32
        %v586 = vld [vmem:[%s585] sm:$0xf]
        %v587 = vld [vmem:[%s585 + $0x4] sm:$0xf]
        %v588 = vld [vmem:[%s585 + $0x8] sm:$0xf]
        %v589 = vld [vmem:[%s585 + $0xc] sm:$0xf]
        %v594 = vunpack.c.l.b16 %v586
        %v595 = vunpack.c.l.b16 %v587
        %v596 = vunpack.c.l.b16 %v588
        %v597 = vunpack.c.l.b16 %v589
        %v598 = vpack.c.b16 %v595, %v594
        %v599 = vpack.c.b16 %v597, %v596
        %v603 = vsel %vm484, %v584, 0
        %605 = vmatprep.subr.bf16.mxu0 0
        %606 = vmatpush1.bf16.msra.mxu0 0
        %607 = vmatprep.subr.bf16.mxu0 0
        %608 = vmatpush1.bf16.msra.mxu0 0
        %609 = vmatprep.subr.bf16.mxu0 0
        %610 = vmatpush1.bf16.msra.mxu0 0
        %611 = vmatprep.subr.bf16.mxu0 0
        %612 = vmatpush1.bf16.msra.mxu0 0
        %613 = vmatprep.subr.bf16.mxu0 0
        %614 = vmatpush1.bf16.msra.mxu0 0
        %615 = vmatprep.subr.bf16.mxu0 0
        %616 = vmatpush1.bf16.msra.mxu0 0
        %617 = vmatprep.subr.bf16.mxu0 0
        %618 = vmatpush1.bf16.msra.mxu0 %v599
        %619 = vmatprep.subr.bf16.mxu0 0
        %620 = vmatpush1.bf16.msra.mxu0 %v598
        %621 = vmatprep.subr.bf16.mxu0 0
        %622 = vmatpush2.bf16.msra.mxu0 0
        %623 = vmatprep.subr.bf16.mxu0 0
        %624 = vmatpush2.bf16.msra.mxu0 0
        %625 = vmatprep.subr.bf16.mxu0 0
        %626 = vmatpush2.bf16.msra.mxu0 0
        %627 = vmatprep.subr.bf16.mxu0 0
        %628 = vmatpush2.bf16.msra.mxu0 0
        %629 = vmatprep.subr.bf16.mxu0 0
        %630 = vmatpush2.bf16.msra.mxu0 0
        %631 = vmatprep.subr.bf16.mxu0 0
        %632 = vmatpush2.bf16.msra.mxu0 0
        %633 = vmatprep.subr.bf16.mxu0 0
        %634 = vmatpush2.bf16.msra.mxu0 0
        %635 = vmatprep.subr.bf16.mxu0 0
        %636 = vmatpush2.bf16.msra.mxu0 0
        %637 = vmatprep.mubr.bf16.mxu0 0
        %638 = vmatmul.mubr.bf16.gmra.mxu0 %v603
        %v639 = vpop.f32.mrf.mxu0
        %v640 = vadd.f32 0.0, %v639
        %v641 = vpop.f32.mrf.mxu0
        %v642 = vpop.f32.mrf.mxu0
        %v643 = vpop.f32.mrf.mxu0
        %644 = vdwg.mxu0
        %v645 = vadd.f32 %v578, %v640
        %s646 = scalar_lea.vmem %s384, 12 [#allocation2]
        %v647 = vld [vmem:[%s646] sm:$0xf]
        %s648 = scalar_lea.vmem [#allocation5], 48
        %v649 = vld [vmem:[%s648] sm:$0xf]
        %v650 = vld [vmem:[%s648 + $0x4] sm:$0xf]
        %v651 = vld [vmem:[%s648 + $0x8] sm:$0xf]
        %v652 = vld [vmem:[%s648 + $0xc] sm:$0xf]
        %v657 = vunpack.c.l.b16 %v649
        %v658 = vunpack.c.l.b16 %v650
        %v659 = vunpack.c.l.b16 %v651
        %v660 = vunpack.c.l.b16 %v652
        %v661 = vpack.c.b16 %v658, %v657
        %v662 = vpack.c.b16 %v660, %v659
        %v666 = vsel %vm484, %v647, 0
        %668 = vmatprep.subr.bf16.mxu0 0
        %669 = vmatpush1.bf16.msra.mxu0 0
        %670 = vmatprep.subr.bf16.mxu0 0
        %671 = vmatpush1.bf16.msra.mxu0 0
        %672 = vmatprep.subr.bf16.mxu0 0
        %673 = vmatpush1.bf16.msra.mxu0 0
        %674 = vmatprep.subr.bf16.mxu0 0
        %675 = vmatpush1.bf16.msra.mxu0 0
        %676 = vmatprep.subr.bf16.mxu0 0
        %677 = vmatpush1.bf16.msra.mxu0 0
        %678 = vmatprep.subr.bf16.mxu0 0
        %679 = vmatpush1.bf16.msra.mxu0 0
        %680 = vmatprep.subr.bf16.mxu0 0
        %681 = vmatpush1.bf16.msra.mxu0 %v662
        %682 = vmatprep.subr.bf16.mxu0 0
        %683 = vmatpush1.bf16.msra.mxu0 %v661
        %684 = vmatprep.subr.bf16.mxu0 0
        %685 = vmatpush2.bf16.msra.mxu0 0
        %686 = vmatprep.subr.bf16.mxu0 0
        %687 = vmatpush2.bf16.msra.mxu0 0
        %688 = vmatprep.subr.bf16.mxu0 0
        %689 = vmatpush2.bf16.msra.mxu0 0
        %690 = vmatprep.subr.bf16.mxu0 0
        %691 = vmatpush2.bf16.msra.mxu0 0
        %692 = vmatprep.subr.bf16.mxu0 0
        %693 = vmatpush2.bf16.msra.mxu0 0
        %694 = vmatprep.subr.bf16.mxu0 0
        %695 = vmatpush2.bf16.msra.mxu0 0
        %696 = vmatprep.subr.bf16.mxu0 0
        %697 = vmatpush2.bf16.msra.mxu0 0
        %698 = vmatprep.subr.bf16.mxu0 0
        %699 = vmatpush2.bf16.msra.mxu0 0
        %700 = vmatprep.mubr.bf16.mxu0 0
        %701 = vmatmul.mubr.bf16.gmra.mxu0 %v666
        %v702 = vpop.f32.mrf.mxu0
        %v703 = vadd.f32 0.0, %v702
        %v704 = vpop.f32.mrf.mxu0
        %v705 = vpop.f32.mrf.mxu0
        %v706 = vpop.f32.mrf.mxu0
        %707 = vdwg.mxu0
        %v708 = vadd.f32 %v645, %v703
        %s709 = scalar_lea.vmem %s384, 16 [#allocation2]
        %v710 = vld [vmem:[%s709] sm:$0xf]
        %s711 = scalar_lea.vmem [#allocation5], 64
        %v712 = vld [vmem:[%s711] sm:$0xf]
        %v713 = vld [vmem:[%s711 + $0x4] sm:$0xf]
        %v714 = vld [vmem:[%s711 + $0x8] sm:$0xf]
        %v715 = vld [vmem:[%s711 + $0xc] sm:$0xf]
        %v720 = vunpack.c.l.b16 %v712
        %v721 = vunpack.c.l.b16 %v713
        %v722 = vunpack.c.l.b16 %v714
        %v723 = vunpack.c.l.b16 %v715
        %v724 = vpack.c.b16 %v721, %v720
        %v725 = vpack.c.b16 %v723, %v722
        %v729 = vsel %vm484, %v710, 0
        %731 = vmatprep.subr.bf16.mxu0 0
        %732 = vmatpush1.bf16.msra.mxu0 0
        %733 = vmatprep.subr.bf16.mxu0 0
        %734 = vmatpush1.bf16.msra.mxu0 0
        %735 = vmatprep.subr.bf16.mxu0 0
        %736 = vmatpush1.bf16.msra.mxu0 0
        %737 = vmatprep.subr.bf16.mxu0 0
        %738 = vmatpush1.bf16.msra.mxu0 0
        %739 = vmatprep.subr.bf16.mxu0 0
        %740 = vmatpush1.bf16.msra.mxu0 0
        %741 = vmatprep.subr.bf16.mxu0 0
        %742 = vmatpush1.bf16.msra.mxu0 0
        %743 = vmatprep.subr.bf16.mxu0 0
        %744 = vmatpush1.bf16.msra.mxu0 %v725
        %745 = vmatprep.subr.bf16.mxu0 0
        %746 = vmatpush1.bf16.msra.mxu0 %v724
        %747 = vmatprep.subr.bf16.mxu0 0
        %748 = vmatpush2.bf16.msra.mxu0 0
        %749 = vmatprep.subr.bf16.mxu0 0
        %750 = vmatpush2.bf16.msra.mxu0 0
        %751 = vmatprep.subr.bf16.mxu0 0
        %752 = vmatpush2.bf16.msra.mxu0 0
        %753 = vmatprep.subr.bf16.mxu0 0
        %754 = vmatpush2.bf16.msra.mxu0 0
        %755 = vmatprep.subr.bf16.mxu0 0
        %756 = vmatpush2.bf16.msra.mxu0 0
        %757 = vmatprep.subr.bf16.mxu0 0
        %758 = vmatpush2.bf16.msra.mxu0 0
        %759 = vmatprep.subr.bf16.mxu0 0
        %760 = vmatpush2.bf16.msra.mxu0 0
        %761 = vmatprep.subr.bf16.mxu0 0
        %762 = vmatpush2.bf16.msra.mxu0 0
        %763 = vmatprep.mubr.bf16.mxu0 0
        %764 = vmatmul.mubr.bf16.gmra.mxu0 %v729
        %v765 = vpop.f32.mrf.mxu0
        %v766 = vadd.f32 0.0, %v765
        %v767 = vpop.f32.mrf.mxu0
        %v768 = vpop.f32.mrf.mxu0
        %v769 = vpop.f32.mrf.mxu0
        %770 = vdwg.mxu0
        %v771 = vadd.f32 %v708, %v766
        %s772 = scalar_lea.vmem %s384, 20 [#allocation2]
        %v773 = vld [vmem:[%s772] sm:$0xf]
        %s774 = scalar_lea.vmem [#allocation5], 80
        %v775 = vld [vmem:[%s774] sm:$0xf]
        %v776 = vld [vmem:[%s774 + $0x4] sm:$0xf]
        %v777 = vld [vmem:[%s774 + $0x8] sm:$0xf]
        %v778 = vld [vmem:[%s774 + $0xc] sm:$0xf]
        %v783 = vunpack.c.l.b16 %v775
        %v784 = vunpack.c.l.b16 %v776
        %v785 = vunpack.c.l.b16 %v777
        %v786 = vunpack.c.l.b16 %v778
        %v787 = vpack.c.b16 %v784, %v783
        %v788 = vpack.c.b16 %v786, %v785
        %v792 = vsel %vm484, %v773, 0
        %794 = vmatprep.subr.bf16.mxu0 0
        %795 = vmatpush1.bf16.msra.mxu0 0
        %796 = vmatprep.subr.bf16.mxu0 0
        %797 = vmatpush1.bf16.msra.mxu0 0
        %798 = vmatprep.subr.bf16.mxu0 0
        %799 = vmatpush1.bf16.msra.mxu0 0
        %800 = vmatprep.subr.bf16.mxu0 0
        %801 = vmatpush1.bf16.msra.mxu0 0
        %802 = vmatprep.subr.bf16.mxu0 0
        %803 = vmatpush1.bf16.msra.mxu0 0
        %804 = vmatprep.subr.bf16.mxu0 0
        %805 = vmatpush1.bf16.msra.mxu0 0
        %806 = vmatprep.subr.bf16.mxu0 0
        %807 = vmatpush1.bf16.msra.mxu0 %v788
        %808 = vmatprep.subr.bf16.mxu0 0
        %809 = vmatpush1.bf16.msra.mxu0 %v787
        %810 = vmatprep.subr.bf16.mxu0 0
        %811 = vmatpush2.bf16.msra.mxu0 0
        %812 = vmatprep.subr.bf16.mxu0 0
        %813 = vmatpush2.bf16.msra.mxu0 0
        %814 = vmatprep.subr.bf16.mxu0 0
        %815 = vmatpush2.bf16.msra.mxu0 0
        %816 = vmatprep.subr.bf16.mxu0 0
        %817 = vmatpush2.bf16.msra.mxu0 0
        %818 = vmatprep.subr.bf16.mxu0 0
        %819 = vmatpush2.bf16.msra.mxu0 0
        %820 = vmatprep.subr.bf16.mxu0 0
        %821 = vmatpush2.bf16.msra.mxu0 0
        %822 = vmatprep.subr.bf16.mxu0 0
        %823 = vmatpush2.bf16.msra.mxu0 0
        %824 = vmatprep.subr.bf16.mxu0 0
        %825 = vmatpush2.bf16.msra.mxu0 0
        %826 = vmatprep.mubr.bf16.mxu0 0
        %827 = vmatmul.mubr.bf16.gmra.mxu0 %v792
        %v828 = vpop.f32.mrf.mxu0
        %v829 = vadd.f32 0.0, %v828
        %v830 = vpop.f32.mrf.mxu0
        %v831 = vpop.f32.mrf.mxu0
        %v832 = vpop.f32.mrf.mxu0
        %833 = vdwg.mxu0
        %v834 = vadd.f32 %v771, %v829
        %s835 = scalar_lea.vmem %s384, 24 [#allocation2]
        %v836 = vld [vmem:[%s835] sm:$0xf]
        %s837 = scalar_lea.vmem [#allocation5], 96
        %v838 = vld [vmem:[%s837] sm:$0xf]
        %v839 = vld [vmem:[%s837 + $0x4] sm:$0xf]
        %v840 = vld [vmem:[%s837 + $0x8] sm:$0xf]
        %v841 = vld [vmem:[%s837 + $0xc] sm:$0xf]
        %v846 = vunpack.c.l.b16 %v838
        %v847 = vunpack.c.l.b16 %v839
        %v848 = vunpack.c.l.b16 %v840
        %v849 = vunpack.c.l.b16 %v841
        %v850 = vpack.c.b16 %v847, %v846
        %v851 = vpack.c.b16 %v849, %v848
        %v855 = vsel %vm484, %v836, 0
        %857 = vmatprep.subr.bf16.mxu0 0
        %858 = vmatpush1.bf16.msra.mxu0 0
        %859 = vmatprep.subr.bf16.mxu0 0
        %860 = vmatpush1.bf16.msra.mxu0 0
        %861 = vmatprep.subr.bf16.mxu0 0
        %862 = vmatpush1.bf16.msra.mxu0 0
        %863 = vmatprep.subr.bf16.mxu0 0
        %864 = vmatpush1.bf16.msra.mxu0 0
        %865 = vmatprep.subr.bf16.mxu0 0
        %866 = vmatpush1.bf16.msra.mxu0 0
        %867 = vmatprep.subr.bf16.mxu0 0
        %868 = vmatpush1.bf16.msra.mxu0 0
        %869 = vmatprep.subr.bf16.mxu0 0
        %870 = vmatpush1.bf16.msra.mxu0 %v851
        %871 = vmatprep.subr.bf16.mxu0 0
        %872 = vmatpush1.bf16.msra.mxu0 %v850
        %873 = vmatprep.subr.bf16.mxu0 0
        %874 = vmatpush2.bf16.msra.mxu0 0
        %875 = vmatprep.subr.bf16.mxu0 0
        %876 = vmatpush2.bf16.msra.mxu0 0
        %877 = vmatprep.subr.bf16.mxu0 0
        %878 = vmatpush2.bf16.msra.mxu0 0
        %879 = vmatprep.subr.bf16.mxu0 0
        %880 = vmatpush2.bf16.msra.mxu0 0
        %881 = vmatprep.subr.bf16.mxu0 0
        %882 = vmatpush2.bf16.msra.mxu0 0
        %883 = vmatprep.subr.bf16.mxu0 0
        %884 = vmatpush2.bf16.msra.mxu0 0
        %885 = vmatprep.subr.bf16.mxu0 0
        %886 = vmatpush2.bf16.msra.mxu0 0
        %887 = vmatprep.subr.bf16.mxu0 0
        %888 = vmatpush2.bf16.msra.mxu0 0
        %889 = vmatprep.mubr.bf16.mxu0 0
        %890 = vmatmul.mubr.bf16.gmra.mxu0 %v855
        %v891 = vpop.f32.mrf.mxu0
        %v892 = vadd.f32 0.0, %v891
        %v893 = vpop.f32.mrf.mxu0
        %v894 = vpop.f32.mrf.mxu0
        %v895 = vpop.f32.mrf.mxu0
        %896 = vdwg.mxu0
        %v897 = vadd.f32 %v834, %v892
        %s898 = scalar_lea.vmem %s384, 28 [#allocation2]
        %v899 = vld [vmem:[%s898] sm:$0xf]
        %s900 = scalar_lea.vmem [#allocation5], 112
        %v901 = vld [vmem:[%s900] sm:$0xf]
        %v902 = vld [vmem:[%s900 + $0x4] sm:$0xf]
        %v903 = vld [vmem:[%s900 + $0x8] sm:$0xf]
        %v904 = vld [vmem:[%s900 + $0xc] sm:$0xf]
        %v909 = vunpack.c.l.b16 %v901
        %v910 = vunpack.c.l.b16 %v902
        %v911 = vunpack.c.l.b16 %v903
        %v912 = vunpack.c.l.b16 %v904
        %v913 = vpack.c.b16 %v910, %v909
        %v914 = vpack.c.b16 %v912, %v911
        %v918 = vsel %vm484, %v899, 0
        %920 = vmatprep.subr.bf16.mxu0 0
        %921 = vmatpush1.bf16.msra.mxu0 0
        %922 = vmatprep.subr.bf16.mxu0 0
        %923 = vmatpush1.bf16.msra.mxu0 0
        %924 = vmatprep.subr.bf16.mxu0 0
        %925 = vmatpush1.bf16.msra.mxu0 0
        %926 = vmatprep.subr.bf16.mxu0 0
        %927 = vmatpush1.bf16.msra.mxu0 0
        %928 = vmatprep.subr.bf16.mxu0 0
        %929 = vmatpush1.bf16.msra.mxu0 0
        %930 = vmatprep.subr.bf16.mxu0 0
        %931 = vmatpush1.bf16.msra.mxu0 0
        %932 = vmatprep.subr.bf16.mxu0 0
        %933 = vmatpush1.bf16.msra.mxu0 %v914
        %934 = vmatprep.subr.bf16.mxu0 0
        %935 = vmatpush1.bf16.msra.mxu0 %v913
        %936 = vmatprep.subr.bf16.mxu0 0
        %937 = vmatpush2.bf16.msra.mxu0 0
        %938 = vmatprep.subr.bf16.mxu0 0
        %939 = vmatpush2.bf16.msra.mxu0 0
        %940 = vmatprep.subr.bf16.mxu0 0
        %941 = vmatpush2.bf16.msra.mxu0 0
        %942 = vmatprep.subr.bf16.mxu0 0
        %943 = vmatpush2.bf16.msra.mxu0 0
        %944 = vmatprep.subr.bf16.mxu0 0
        %945 = vmatpush2.bf16.msra.mxu0 0
        %946 = vmatprep.subr.bf16.mxu0 0
        %947 = vmatpush2.bf16.msra.mxu0 0
        %948 = vmatprep.subr.bf16.mxu0 0
        %949 = vmatpush2.bf16.msra.mxu0 0
        %950 = vmatprep.subr.bf16.mxu0 0
        %951 = vmatpush2.bf16.msra.mxu0 0
        %952 = vmatprep.mubr.bf16.mxu0 0
        %953 = vmatmul.mubr.bf16.gmra.mxu0 %v918
        %v954 = vpop.f32.mrf.mxu0
        %v955 = vadd.f32 0.0, %v954
        %v956 = vpop.f32.mrf.mxu0
        %v957 = vpop.f32.mrf.mxu0
        %v958 = vpop.f32.mrf.mxu0
        %959 = vdwg.mxu0
        %v960 = vadd.f32 %v897, %v955
        %s961 = scalar_lea.vmem %s384, 32 [#allocation2]
        %v962 = vld [vmem:[%s961] sm:$0xf]
        %s963 = scalar_lea.vmem [#allocation5], 128
        %v964 = vld [vmem:[%s963] sm:$0xf]
        %v965 = vld [vmem:[%s963 + $0x4] sm:$0xf]
        %v966 = vld [vmem:[%s963 + $0x8] sm:$0xf]
        %v967 = vld [vmem:[%s963 + $0xc] sm:$0xf]
        %v972 = vunpack.c.l.b16 %v964
        %v973 = vunpack.c.l.b16 %v965
        %v974 = vunpack.c.l.b16 %v966
        %v975 = vunpack.c.l.b16 %v967
        %v976 = vpack.c.b16 %v973, %v972
        %v977 = vpack.c.b16 %v975, %v974
        %v981 = vsel %vm484, %v962, 0
        %983 = vmatprep.subr.bf16.mxu0 0
        %984 = vmatpush1.bf16.msra.mxu0 0
        %985 = vmatprep.subr.bf16.mxu0 0
        %986 = vmatpush1.bf16.msra.mxu0 0
        %987 = vmatprep.subr.bf16.mxu0 0
        %988 = vmatpush1.bf16.msra.mxu0 0
        %989 = vmatprep.subr.bf16.mxu0 0
        %990 = vmatpush1.bf16.msra.mxu0 0
        %991 = vmatprep.subr.bf16.mxu0 0
        %992 = vmatpush1.bf16.msra.mxu0 0
        %993 = vmatprep.subr.bf16.mxu0 0
        %994 = vmatpush1.bf16.msra.mxu0 0
        %995 = vmatprep.subr.bf16.mxu0 0
        %996 = vmatpush1.bf16.msra.mxu0 %v977
        %997 = vmatprep.subr.bf16.mxu0 0
        %998 = vmatpush1.bf16.msra.mxu0 %v976
        %999 = vmatprep.subr.bf16.mxu0 0
        %1000 = vmatpush2.bf16.msra.mxu0 0
        %1001 = vmatprep.subr.bf16.mxu0 0
        %1002 = vmatpush2.bf16.msra.mxu0 0
        %1003 = vmatprep.subr.bf16.mxu0 0
        %1004 = vmatpush2.bf16.msra.mxu0 0
        %1005 = vmatprep.subr.bf16.mxu0 0
        %1006 = vmatpush2.bf16.msra.mxu0 0
        %1007 = vmatprep.subr.bf16.mxu0 0
        %1008 = vmatpush2.bf16.msra.mxu0 0
        %1009 = vmatprep.subr.bf16.mxu0 0
        %1010 = vmatpush2.bf16.msra.mxu0 0
        %1011 = vmatprep.subr.bf16.mxu0 0
        %1012 = vmatpush2.bf16.msra.mxu0 0
        %1013 = vmatprep.subr.bf16.mxu0 0
        %1014 = vmatpush2.bf16.msra.mxu0 0
        %1015 = vmatprep.mubr.bf16.mxu0 0
        %1016 = vmatmul.mubr.bf16.gmra.mxu0 %v981
        %v1017 = vpop.f32.mrf.mxu0
        %v1018 = vadd.f32 0.0, %v1017
        %v1019 = vpop.f32.mrf.mxu0
        %v1020 = vpop.f32.mrf.mxu0
        %v1021 = vpop.f32.mrf.mxu0
        %1022 = vdwg.mxu0
        %v1023 = vadd.f32 %v960, %v1018
        %s1024 = scalar_lea.vmem %s384, 36 [#allocation2]
        %v1025 = vld [vmem:[%s1024] sm:$0xf]
        %s1026 = scalar_lea.vmem [#allocation5], 144
        %v1027 = vld [vmem:[%s1026] sm:$0xf]
        %v1028 = vld [vmem:[%s1026 + $0x4] sm:$0xf]
        %v1029 = vld [vmem:[%s1026 + $0x8] sm:$0xf]
        %v1030 = vld [vmem:[%s1026 + $0xc] sm:$0xf]
        %v1035 = vunpack.c.l.b16 %v1027
        %v1036 = vunpack.c.l.b16 %v1028
        %v1037 = vunpack.c.l.b16 %v1029
        %v1038 = vunpack.c.l.b16 %v1030
        %v1039 = vpack.c.b16 %v1036, %v1035
        %v1040 = vpack.c.b16 %v1038, %v1037
        %v1044 = vsel %vm484, %v1025, 0
        %1046 = vmatprep.subr.bf16.mxu0 0
        %1047 = vmatpush1.bf16.msra.mxu0 0
        %1048 = vmatprep.subr.bf16.mxu0 0
        %1049 = vmatpush1.bf16.msra.mxu0 0
        %1050 = vmatprep.subr.bf16.mxu0 0
        %1051 = vmatpush1.bf16.msra.mxu0 0
        %1052 = vmatprep.subr.bf16.mxu0 0
        %1053 = vmatpush1.bf16.msra.mxu0 0
        %1054 = vmatprep.subr.bf16.mxu0 0
        %1055 = vmatpush1.bf16.msra.mxu0 0
        %1056 = vmatprep.subr.bf16.mxu0 0
        %1057 = vmatpush1.bf16.msra.mxu0 0
        %1058 = vmatprep.subr.bf16.mxu0 0
        %1059 = vmatpush1.bf16.msra.mxu0 %v1040
        %1060 = vmatprep.subr.bf16.mxu0 0
        %1061 = vmatpush1.bf16.msra.mxu0 %v1039
        %1062 = vmatprep.subr.bf16.mxu0 0
        %1063 = vmatpush2.bf16.msra.mxu0 0
        %1064 = vmatprep.subr.bf16.mxu0 0
        %1065 = vmatpush2.bf16.msra.mxu0 0
        %1066 = vmatprep.subr.bf16.mxu0 0
        %1067 = vmatpush2.bf16.msra.mxu0 0
        %1068 = vmatprep.subr.bf16.mxu0 0
        %1069 = vmatpush2.bf16.msra.mxu0 0
        %1070 = vmatprep.subr.bf16.mxu0 0
        %1071 = vmatpush2.bf16.msra.mxu0 0
        %1072 = vmatprep.subr.bf16.mxu0 0
        %1073 = vmatpush2.bf16.msra.mxu0 0
        %1074 = vmatprep.subr.bf16.mxu0 0
        %1075 = vmatpush2.bf16.msra.mxu0 0
        %1076 = vmatprep.subr.bf16.mxu0 0
        %1077 = vmatpush2.bf16.msra.mxu0 0
        %1078 = vmatprep.mubr.bf16.mxu0 0
        %1079 = vmatmul.mubr.bf16.gmra.mxu0 %v1044
        %v1080 = vpop.f32.mrf.mxu0
        %v1081 = vadd.f32 0.0, %v1080
        %v1082 = vpop.f32.mrf.mxu0
        %v1083 = vpop.f32.mrf.mxu0
        %v1084 = vpop.f32.mrf.mxu0
        %1085 = vdwg.mxu0
        %v1086 = vadd.f32 %v1023, %v1081
        %s1087 = scalar_lea.vmem %s384, 40 [#allocation2]
        %v1088 = vld [vmem:[%s1087] sm:$0xf]
        %s1089 = scalar_lea.vmem [#allocation5], 160
        %v1090 = vld [vmem:[%s1089] sm:$0xf]
        %v1091 = vld [vmem:[%s1089 + $0x4] sm:$0xf]
        %v1092 = vld [vmem:[%s1089 + $0x8] sm:$0xf]
        %v1093 = vld [vmem:[%s1089 + $0xc] sm:$0xf]
        %v1098 = vunpack.c.l.b16 %v1090
        %v1099 = vunpack.c.l.b16 %v1091
        %v1100 = vunpack.c.l.b16 %v1092
        %v1101 = vunpack.c.l.b16 %v1093
        %v1102 = vpack.c.b16 %v1099, %v1098
        %v1103 = vpack.c.b16 %v1101, %v1100
        %v1107 = vsel %vm484, %v1088, 0
        %1109 = vmatprep.subr.bf16.mxu0 0
        %1110 = vmatpush1.bf16.msra.mxu0 0
        %1111 = vmatprep.subr.bf16.mxu0 0
        %1112 = vmatpush1.bf16.msra.mxu0 0
        %1113 = vmatprep.subr.bf16.mxu0 0
        %1114 = vmatpush1.bf16.msra.mxu0 0
        %1115 = vmatprep.subr.bf16.mxu0 0
        %1116 = vmatpush1.bf16.msra.mxu0 0
        %1117 = vmatprep.subr.bf16.mxu0 0
        %1118 = vmatpush1.bf16.msra.mxu0 0
        %1119 = vmatprep.subr.bf16.mxu0 0
        %1120 = vmatpush1.bf16.msra.mxu0 0
        %1121 = vmatprep.subr.bf16.mxu0 0
        %1122 = vmatpush1.bf16.msra.mxu0 %v1103
        %1123 = vmatprep.subr.bf16.mxu0 0
        %1124 = vmatpush1.bf16.msra.mxu0 %v1102
        %1125 = vmatprep.subr.bf16.mxu0 0
        %1126 = vmatpush2.bf16.msra.mxu0 0
        %1127 = vmatprep.subr.bf16.mxu0 0
        %1128 = vmatpush2.bf16.msra.mxu0 0
        %1129 = vmatprep.subr.bf16.mxu0 0
        %1130 = vmatpush2.bf16.msra.mxu0 0
        %1131 = vmatprep.subr.bf16.mxu0 0
        %1132 = vmatpush2.bf16.msra.mxu0 0
        %1133 = vmatprep.subr.bf16.mxu0 0
        %1134 = vmatpush2.bf16.msra.mxu0 0
        %1135 = vmatprep.subr.bf16.mxu0 0
        %1136 = vmatpush2.bf16.msra.mxu0 0
        %1137 = vmatprep.subr.bf16.mxu0 0
        %1138 = vmatpush2.bf16.msra.mxu0 0
        %1139 = vmatprep.subr.bf16.mxu0 0
        %1140 = vmatpush2.bf16.msra.mxu0 0
        %1141 = vmatprep.mubr.bf16.mxu0 0
        %1142 = vmatmul.mubr.bf16.gmra.mxu0 %v1107
        %v1143 = vpop.f32.mrf.mxu0
        %v1144 = vadd.f32 0.0, %v1143
        %v1145 = vpop.f32.mrf.mxu0
        %v1146 = vpop.f32.mrf.mxu0
        %v1147 = vpop.f32.mrf.mxu0
        %1148 = vdwg.mxu0
        %v1149 = vadd.f32 %v1086, %v1144
        %s1150 = scalar_lea.vmem %s384, 44 [#allocation2]
        %v1151 = vld [vmem:[%s1150] sm:$0xf]
        %s1152 = scalar_lea.vmem [#allocation5], 176
        %v1153 = vld [vmem:[%s1152] sm:$0xf]
        %v1154 = vld [vmem:[%s1152 + $0x4] sm:$0xf]
        %v1155 = vld [vmem:[%s1152 + $0x8] sm:$0xf]
        %v1156 = vld [vmem:[%s1152 + $0xc] sm:$0xf]
        %v1161 = vunpack.c.l.b16 %v1153
        %v1162 = vunpack.c.l.b16 %v1154
        %v1163 = vunpack.c.l.b16 %v1155
        %v1164 = vunpack.c.l.b16 %v1156
        %v1165 = vpack.c.b16 %v1162, %v1161
        %v1166 = vpack.c.b16 %v1164, %v1163
        %v1170 = vsel %vm484, %v1151, 0
        %1172 = vmatprep.subr.bf16.mxu0 0
        %1173 = vmatpush1.bf16.msra.mxu0 0
        %1174 = vmatprep.subr.bf16.mxu0 0
        %1175 = vmatpush1.bf16.msra.mxu0 0
        %1176 = vmatprep.subr.bf16.mxu0 0
        %1177 = vmatpush1.bf16.msra.mxu0 0
        %1178 = vmatprep.subr.bf16.mxu0 0
        %1179 = vmatpush1.bf16.msra.mxu0 0
        %1180 = vmatprep.subr.bf16.mxu0 0
        %1181 = vmatpush1.bf16.msra.mxu0 0
        %1182 = vmatprep.subr.bf16.mxu0 0
        %1183 = vmatpush1.bf16.msra.mxu0 0
        %1184 = vmatprep.subr.bf16.mxu0 0
        %1185 = vmatpush1.bf16.msra.mxu0 %v1166
        %1186 = vmatprep.subr.bf16.mxu0 0
        %1187 = vmatpush1.bf16.msra.mxu0 %v1165
        %1188 = vmatprep.subr.bf16.mxu0 0
        %1189 = vmatpush2.bf16.msra.mxu0 0
        %1190 = vmatprep.subr.bf16.mxu0 0
        %1191 = vmatpush2.bf16.msra.mxu0 0
        %1192 = vmatprep.subr.bf16.mxu0 0
        %1193 = vmatpush2.bf16.msra.mxu0 0
        %1194 = vmatprep.subr.bf16.mxu0 0
        %1195 = vmatpush2.bf16.msra.mxu0 0
        %1196 = vmatprep.subr.bf16.mxu0 0
        %1197 = vmatpush2.bf16.msra.mxu0 0
        %1198 = vmatprep.subr.bf16.mxu0 0
        %1199 = vmatpush2.bf16.msra.mxu0 0
        %1200 = vmatprep.subr.bf16.mxu0 0
        %1201 = vmatpush2.bf16.msra.mxu0 0
        %1202 = vmatprep.subr.bf16.mxu0 0
        %1203 = vmatpush2.bf16.msra.mxu0 0
        %1204 = vmatprep.mubr.bf16.mxu0 0
        %1205 = vmatmul.mubr.bf16.gmra.mxu0 %v1170
        %v1206 = vpop.f32.mrf.mxu0
        %v1207 = vadd.f32 0.0, %v1206
        %v1208 = vpop.f32.mrf.mxu0
        %v1209 = vpop.f32.mrf.mxu0
        %v1210 = vpop.f32.mrf.mxu0
        %1211 = vdwg.mxu0
        %v1212 = vadd.f32 %v1149, %v1207
        %v1213 = vld [vmem:[%s2] sm:$0x1]
        %v1215 = vlaneseq
        %v1216 = vshrl.u32 %v1215, 7
        %v1217 = vsub.s32 0, %v1216
        %v1218 = vrot.slane %v1213, %v1217
        %v1220 = vadd.f32 %v1212, %v1218
        %v1221 = vmax.f32 %v1220, 0.0
        %v1222 = vpack.c.bf16 %v1221, %v1221
        %v1223 = vld [vmem:[%s3] sm:$0xf]
        %v1224 = vld [vmem:[%s3 + $0x4] sm:$0xf]
        %v1225 = vld [vmem:[%s3 + $0x8] sm:$0xf]
        %v1226 = vld [vmem:[%s3 + $0xc] sm:$0xf]
        %v1227 = vld [vmem:[%s4] sm:$0x1]
        %v1229 = vlaneseq
        %v1230 = vshrl.u32 %v1229, 7
        %v1231 = vsub.s32 0, %v1230
        %v1232 = vrot.slane %v1227, %v1231
        %v1238 = vunpack.c.l.b16 %v1223
        %v1239 = vunpack.c.l.b16 %v1224
        %v1240 = vunpack.c.l.b16 %v1225
        %v1241 = vunpack.c.l.b16 %v1226
        %v1242 = vpack.c.b16 %v1239, %v1238
        %v1243 = vpack.c.b16 %v1241, %v1240
        %v1247 = vsel %vm484, %v1222, 0
        %1249 = vmatprep.subr.bf16.mxu0 0
        %1250 = vmatpush1.bf16.msra.mxu0 0
        %1251 = vmatprep.subr.bf16.mxu0 0
        %1252 = vmatpush1.bf16.msra.mxu0 0
        %1253 = vmatprep.subr.bf16.mxu0 0
        %1254 = vmatpush1.bf16.msra.mxu0 0
        %1255 = vmatprep.subr.bf16.mxu0 0
        %1256 = vmatpush1.bf16.msra.mxu0 0
        %1257 = vmatprep.subr.bf16.mxu0 0
        %1258 = vmatpush1.bf16.msra.mxu0 0
        %1259 = vmatprep.subr.bf16.mxu0 0
        %1260 = vmatpush1.bf16.msra.mxu0 0
        %1261 = vmatprep.subr.bf16.mxu0 0
        %1262 = vmatpush1.bf16.msra.mxu0 %v1243
        %1263 = vmatprep.subr.bf16.mxu0 0
        %1264 = vmatpush1.bf16.msra.mxu0 %v1242
        %1265 = vmatprep.subr.bf16.mxu0 0
        %1266 = vmatpush2.bf16.msra.mxu0 0
        %1267 = vmatprep.subr.bf16.mxu0 0
        %1268 = vmatpush2.bf16.msra.mxu0 0
        %1269 = vmatprep.subr.bf16.mxu0 0
        %1270 = vmatpush2.bf16.msra.mxu0 0
        %1271 = vmatprep.subr.bf16.mxu0 0
        %1272 = vmatpush2.bf16.msra.mxu0 0
        %1273 = vmatprep.subr.bf16.mxu0 0
        %1274 = vmatpush2.bf16.msra.mxu0 0
        %1275 = vmatprep.subr.bf16.mxu0 0
        %1276 = vmatpush2.bf16.msra.mxu0 0
        %1277 = vmatprep.subr.bf16.mxu0 0
        %1278 = vmatpush2.bf16.msra.mxu0 0
        %1279 = vmatprep.subr.bf16.mxu0 0
        %1280 = vmatpush2.bf16.msra.mxu0 0
        %1281 = vmatprep.mubr.bf16.mxu0 0
        %1282 = vmatmul.mubr.bf16.gmra.mxu0 %v1247
        %v1283 = vpop.f32.mrf.mxu0
        %v1284 = vadd.f32 %v1232, %v1283
        %v1285 = vpop.f32.mrf.mxu0
        %v1286 = vpop.f32.mrf.mxu0
        %v1287 = vpop.f32.mrf.mxu0
        %1288 = vdwg.mxu0
        %vm1289 = vcmask 80896
        %v1290 = vsel %vm1289, %v1284, -inf
        %1291 = vmax.xlane.f32.xlu0 %v1290
        %v1292 = vpop.xlane.xlu0 %1291
        %v1293 = vsub.f32 %v1284, %v1292
        %v1294 = vmul.f32 %v1293, 1.442695
        %v1295 = vpow.pop %v1294
        %v1296 = vsel %vm1289, %v1295, 0.0
        %1297 = vadd.xlane.f32.xlu0 %v1296
        %v1298 = vpop.xlane.xlu0 %1297
        %v1299 = vlog2.pop %v1298
        %v1300 = vmul.f32 %v1299, 0.6931472
        %v1301 = vsub.f32 %v1293, %v1300
        %1302 = vst.msk [vmem:[%s432] sm:$0xff] %vm1289, %v1301
        %v1303 = vld [vmem:[%s451] sm:$0xff]
        %v1304 = vld [vmem:[%s458] sm:$0xff]
        %vm1305 = vcmp.gt.f32.partialorder %v1304, 0.0
        %v1306 = vlaneseq
        %v1307 = vand.u32 %v1306, 127
        %1308 = vset.pattern.permute.xlu0 0
        %1309 = vperm.xlu0 %1308, %v1303
        %v1310 = vpop.permute.xlu0 %1309
        %vm1311 = vcmp.eq.s32.totalorder %v1307, %v1310
        %v1312 = vsel %vm1311, 1, 0
        %v1313 = vcvt.s32.f32 %v1312
        %v1314 = vmul.f32 %v1301, %v1313
        %v1315 = vsel %vm1289, %v1314, 0.0
        %1316 = vadd.xlane.f32.xlu0 %v1315
        %v1317 = vpop.xlane.xlu0 %1316
        %v1318 = vsub.f32 0.0, %v1317
        %v1319 = vsel %vm1305, %v1318, 0.0
        %v1320 = vsel %vm1289, %v1301, -inf
        %1321 = vmax.xlane.f32.xlu0 %v1320
        %v1322 = vpop.xlane.xlu0 %1321
        %vm1323 = vcmp.eq.f32.partialorder %v1301, %v1322
        %v1324 = vsel %vm1323, %v1307, 10
        %v1325 = vsel %vm1289, %v1324, 2147483647
        %v1326 = vand.u32 %v1325, 65535
        %v1327 = vshra.s32 %v1325, 16
        %v1328 = vcvt.s32.f32 %v1326
        %v1329 = vcvt.s32.f32 %v1327
        %1330 = vmin.xlane.f32.xlu0 %v1329
        %v1331 = vpop.xlane.xlu0 %1330
        %vm1332 = vcmp.eq.f32.partialorder %v1329, %v1331
        %v1333 = vsel %vm1332, %v1328, inf
        %1334 = vmin.xlane.f32.xlu0 %v1333
        %v1335 = vpop.xlane.xlu0 %1334
        %v1336 = vcvt.f32.s32 %v1335
        %v1337 = vcvt.f32.s32 %v1331
        %v1338 = vshll.u32 %v1337, 16
        %v1339 = vadd.s32 %v1338, %v1336
        %vm1340 = vcmp.eq.s32.totalorder %v1339, %v1303
        %vm1341 = vmand %vm1340, %vm1305
        %v1342 = vsel %vm1341, 1.0, 0.0
        %vm1343 = vcmask 7168
        %v1344 = vsel %vm1343, %v1319, 0.0
        %1345 = vadd.xlane.f32.xlu0 %v1344
        %v1346 = vpop.xlane.xlu0 %1345
        %v1347 = vrot.slane %v1346, 4
        %v1348 = vadd.f32 %v1346, %v1347
        %v1349 = vrot.slane %v1348, 2
        %v1350 = vadd.f32 %v1348, %v1349
        %v1351 = vrot.slane %v1350, 1
        %v1352 = vadd.f32 %v1350, %v1351
        %s1353 = vtos %v1352
        %v1354 = vstv %s1353
        %1355 = vst [vmem:[%s438] sm:$0x1] %v1354
        %v1356 = vsel %vm1343, %v1342, 0.0
        %1357 = vadd.xlane.f32.xlu0 %v1356
        %v1358 = vpop.xlane.xlu0 %1357
        %v1359 = vrot.slane %v1358, 4
        %v1360 = vadd.f32 %v1358, %v1359
        %v1361 = vrot.slane %v1360, 2
        %v1362 = vadd.f32 %v1360, %v1361
        %v1363 = vrot.slane %v1362, 1
        %v1364 = vadd.f32 %v1362, %v1363
        %s1365 = vtos %v1364
        %v1366 = vstv %s1365
        %1367 = vst [vmem:[%s444] sm:$0x1] %v1366
        %s1368 = sand.u32 %s221, 1
        %s1369 = scalar_lea.sflag [#allocation4], %s1368
        %s1370 = sand.u32 %s221, 1
        %s1371 = smul.addr %s1370, 8
        %s1372 = scalar_lea.vmem [#allocation7], %s1371
        %s1373 = sand.u32 %s31, 1
        %s1374 = scalar_lea.sflag [#allocation9], %s1373
        %s1375 = sand.u32 %s249, 1
        %s1376 = scalar_lea.vmem [#allocation8], %s1375
        %s1377 = sand.u32 %s31, 1
        %s1378 = scalar_lea.sflag [#allocation9], %s1377
        %s1379 = sand.u32 %s277, 1
        %s1380 = scalar_lea.vmem [#allocation10], %s1379
        // Predicated region
        $region57: #{tpu_custom_call.1} parent=47 // pred_check
          %p1381 = pneg %p231
        $region58: #{tpu_custom_call.1} parent=47 // pred_check_branch
          %1383 = sbr.rel (%p1381) target = $region60
        $region59: #{tpu_custom_call.1} parent=47 // pred_region
          %s1385 = ssub.s32 128, 128
          %1386 = vsyncadd %s1369, %s1385
          %s1387 = sadd.s32 %s36, %s35
          %s1388 = smul.addr %s1387, 128
          %s1389 = scalar_lea.hbm %s7, %s1388
          %s1391 = sshll.u32 %s1372, 4
          %s1392 = int_to_ptr.vmem [resolvable:$true] %s1391
          %1394 = dma.vmem_to_hbm [thread:$0]  %s1392, 128, %s1389, %s1369
        $region60: #{tpu_custom_call.1} parent=47 // pred_fallthru
          _
        // Predicated region
        $region61: #{tpu_custom_call.1} parent=47 // pred_check
          %p1395 = pneg %p259
        $region62: #{tpu_custom_call.1} parent=47 // pred_check_branch
          %1397 = sbr.rel (%p1395) target = $region64
        $region63: #{tpu_custom_call.1} parent=47 // pred_region
          %s1399 = ssub.s32 16, 16
          %1400 = vsyncadd %s1374, %s1399
          %s1401 = sadd.s32 %s36, %s35
          %s1402 = smul.addr %s1401, 16
          %s1403 = scalar_lea.hbm %s8, %s1402
          %s1405 = sshll.u32 %s1376, 4
          %s1406 = int_to_ptr.vmem [resolvable:$true] %s1405
          %1408 = dma.vmem_to_hbm [thread:$0]  %s1406, 16, %s1403, %s1374
        $region64: #{tpu_custom_call.1} parent=47 // pred_fallthru
          _
        // Predicated region
        $region65: #{tpu_custom_call.1} parent=47 // pred_check
          %p1409 = pneg %p287
        $region66: #{tpu_custom_call.1} parent=47 // pred_check_branch
          %1411 = sbr.rel (%p1409) target = $region68
        $region67: #{tpu_custom_call.1} parent=47 // pred_region
          %s1413 = ssub.s32 16, 16
          %1414 = vsyncadd %s1378, %s1413
          %s1415 = sadd.s32 %s36, %s35
          %s1416 = smul.addr %s1415, 16
          %s1417 = scalar_lea.hbm %s9, %s1416
          %s1419 = sshll.u32 %s1380, 4
          %s1420 = int_to_ptr.vmem [resolvable:$true] %s1419
          %1422 = dma.vmem_to_hbm [thread:$0]  %s1420, 16, %s1417, %s1378
        $region68: #{tpu_custom_call.1} parent=47 // pred_fallthru
          _
      $region48: #{tpu_custom_call.1} parent=5 // pred_fallthru
        _
      %p1423 = scmp.le.s32.totalorder 2, %s26
      // Predicated region
      $region69: #{tpu_custom_call.1} parent=5 // pred_check
        %p1424 = pneg %p1423
      $region70: #{tpu_custom_call.1} parent=5 // pred_check_branch
        %1426 = sbr.rel (%p1424) target = $region72
      $region71: #{tpu_custom_call.1} parent=5 // pred_region
        %s1427 = ssub.s32 %s26, 2
        // Predicated region
        $region73: #{tpu_custom_call.1} parent=71 // pred_check
          %p1428 = pneg %p237
        $region74: #{tpu_custom_call.1} parent=71 // pred_check_branch
          %1430 = sbr.rel (%p1428) target = $region76
        $region75: #{tpu_custom_call.1} parent=71 // pred_region
          %s1431 = sand.u32 %s222, 1
          %s1432 = scalar_lea.sflag [#allocation4], %s1431
          %s1433 = sand.u32 %s222, 1
          %s1434 = smul.addr %s1433, 8
          %s1435 = scalar_lea.vmem [#allocation7], %s1434
          %1436 = dma.done %s1432, 128
        $region76: #{tpu_custom_call.1} parent=71 // pred_fallthru
          _
        // Predicated region
        $region77: #{tpu_custom_call.1} parent=71 // pred_check
          %p1437 = pneg %p265
        $region78: #{tpu_custom_call.1} parent=71 // pred_check_branch
          %1439 = sbr.rel (%p1437) target = $region80
        $region79: #{tpu_custom_call.1} parent=71 // pred_region
          %s1440 = sand.u32 %s32, 1
          %s1441 = scalar_lea.sflag [#allocation9], %s1440
          %s1442 = sand.u32 %s250, 1
          %s1443 = scalar_lea.vmem [#allocation8], %s1442
          %1444 = dma.done %s1441, 16
        $region80: #{tpu_custom_call.1} parent=71 // pred_fallthru
          _
        // Predicated region
        $region81: #{tpu_custom_call.1} parent=71 // pred_check
          %p1445 = pneg %p293
        $region82: #{tpu_custom_call.1} parent=71 // pred_check_branch
          %1447 = sbr.rel (%p1445) target = $region84
        $region83: #{tpu_custom_call.1} parent=71 // pred_region
          %s1448 = sand.u32 %s32, 1
          %s1449 = scalar_lea.sflag [#allocation9], %s1448
          %s1450 = sand.u32 %s278, 1
          %s1451 = scalar_lea.vmem [#allocation10], %s1450
          %1452 = dma.done %s1449, 16
        $region84: #{tpu_custom_call.1} parent=71 // pred_fallthru
          _
      $region72: #{tpu_custom_call.1} parent=5 // pred_fallthru
        _
    $region6: #{tpu_custom_call.1} parent=1 // loop_footer
      %s30 = sadd.s32 1, %s26
    $region7: #{tpu_custom_call.1} parent=1 // loop_footer_branch
      %25 = sbr.rel target = $region3
    $region8: #{tpu_custom_call.1} parent=1 // loop_exit
      _
    %1453 = vsyncpa [#allocation3], 1
    %s1454 = scalar_lea.sflag [#allocation3], 1
    %1455 = vsyncpa %s1454, 1
    %1456 = vsyncpa [#allocation6], 1
    %1457 = vsyncpa [#allocation4], 1
    %s1458 = scalar_lea.sflag [#allocation4], 1
    %1459 = vsyncpa %s1458, 1
    %1460 = vsyncpa [#allocation9], 1
    %s1461 = scalar_lea.sflag [#allocation9], 1
    %1462 = vsyncpa %s1461, 1

</llo_original>
